<compile_context>
chip_gen: v7x
topology: tpu7x:2x2x1
jax: 0.10.0
libtpu: 0.0.40
codegen_flags: <defaults>
</compile_context>

<pallas_src>
import functools

import jax
import jax.numpy as jnp
from jax.experimental import pallas as pl
from jax.experimental.pallas import tpu as pltpu

LATENT_SIZE = 16
N_COND = 5                      # ['Hs', 'Tz', 'Speed', 'Heading', 'sensor']
IN_DIM = LATENT_SIZE + N_COND   # 21
HID = (20, 10, 5)
BN_EPS = 1e-5
_STATS_ROWS = 8                 # sublane-aligned rows per per-tile stats block
_VMEM_LIMIT = 48 * 1024 * 1024  # fits v7x's 64 MiB physical VMEM with headroom


def _round_up(n, m):
    return (n + m - 1) // m * m


# -----------------------------------------------------------------------------
# Kernels
# -----------------------------------------------------------------------------
def _linear_stats_kernel(x_ref, w_ref, p_ref, stats_ref):
    """p = x @ W1 (bias is inert under train-mode BN); also emit this tile's
    (sum, sum-of-squares) of p so BN1 statistics need no second pass.
    Zero-padded batch rows contribute exactly zero to both sums."""
    q = jnp.dot(x_ref[...], w_ref[...], preferred_element_type=jnp.float32)
    p_ref[...] = q.astype(p_ref.dtype)
    s = jnp.sum(q, axis=0, keepdims=True)
    ss = jnp.sum(q * q, axis=0, keepdims=True)
    pad = jnp.zeros((_STATS_ROWS - 2, q.shape[1]), jnp.float32)
    stats_ref[...] = jnp.concatenate([s, ss, pad], axis=0)


def _bn_relu_linear_stats_kernel(p_ref, s_ref, t_ref, w_ref, q_ref, stats_ref,
                                 *, b_tile, batch):
    """a = relu(p * scale + shift); q = a @ W; emit per-tile (sum, sumsq) of q.
    Rows beyond the true batch (zero padding) are masked to zero so the BN
    shift cannot leak padded rows into the next layer's statistics."""
    i = pl.program_id(0)
    p = p_ref[...].astype(jnp.float32)
    a = jnp.maximum(p * s_ref[...] + t_ref[...], 0.0)
    row = jax.lax.broadcasted_iota(jnp.int32, a.shape, 0) + i * b_tile
    a = jnp.where(row < batch, a, 0.0)
    q = jnp.dot(a.astype(jnp.bfloat16), w_ref[...],
                preferred_element_type=jnp.float32)
    q_ref[...] = q.astype(q_ref.dtype)
    s = jnp.sum(q, axis=0, keepdims=True)
    ss = jnp.sum(q * q, axis=0, keepdims=True)
    pad = jnp.zeros((_STATS_ROWS - 2, q.shape[1]), jnp.float32)
    stats_ref[...] = jnp.concatenate([s, ss, pad], axis=0)


def _bn_relu_head_kernel(p_ref, s_ref, t_ref, w_ref, b_ref, o_ref):
    """a = relu(p * scale + shift); y = a @ w4 + b4, with the 5->1 projection
    written as an elementwise multiply + lane reduction (avoids a degenerate
    1-wide MXU matmul). Padded batch rows are sliced off by the wrapper."""
    p = p_ref[...].astype(jnp.float32)
    a = jnp.maximum(p * s_ref[...] + t_ref[...], 0.0)
    y = jnp.sum(a * w_ref[...], axis=1, keepdims=True) + b_ref[...]
    o_ref[...] = y.astype(o_ref.dtype)


# -----------------------------------------------------------------------------
# BN fold: per-tile partial sums -> (scale, shift) — tiny per-feature XLA work
# -----------------------------------------------------------------------------
def _fold_stats(stats, gamma, beta, batch):
    """Train-mode BatchNorm1d fold: biased variance, eps=1e-5, affine."""
    s = jnp.sum(stats[0::_STATS_ROWS], axis=0)       # (F,) sum of pre-acts
    ss = jnp.sum(stats[1::_STATS_ROWS], axis=0)      # (F,) sum of squares
    mean = s / batch
    var = jnp.maximum(ss / batch - mean * mean, 0.0)  # biased; clamp fp noise
    scale = gamma.reshape(-1) * jax.lax.rsqrt(var + BN_EPS)
    shift = beta.reshape(-1) - mean * scale
    return (scale.reshape(1, -1).astype(jnp.float32),
            shift.reshape(1, -1).astype(jnp.float32))


# -----------------------------------------------------------------------------
# Forward pass: 4 batch-tiled, pipelined Pallas kernels (one per Linear layer)
# -----------------------------------------------------------------------------
def generator_forward(x, params, *, b_tile=8192):
    """x: (B, 21) float -> (B, 1) float32 (train-mode BN semantics)."""
    batch = x.shape[0]

    # Batch tiling: multiple of 8 sublanes; cap the tile so the grid has >=4
    # steps whenever the batch allows it (keeps both v7x TensorCores busy
    # under dimension_semantics=("parallel",)).
    b_tile = max(8, min(_round_up(b_tile, 8), _round_up(pl.cdiv(batch, 4), 8)))
    b_pad = _round_up(batch, b_tile)
    num_tiles = b_pad // b_tile
    grid = (num_tiles,)

    bf16, f32 = jnp.bfloat16, jnp.float32
    xb = x.astype(bf16)                               # halve the x HBM stream
    if b_pad != batch:
        xb = jnp.pad(xb, ((0, b_pad - batch), (0, 0)))  # zero rows, masked later
    w1 = params["w1"].astype(bf16)
    w2 = params["w2"].astype(bf16)
    w3 = params["w3"].astype(bf16)
    w4_row = params["w4"].astype(f32).reshape(1, HID[2])   # (1, 5)
    b4 = params["b4"].astype(f32).reshape(1, 1)

    cp = pltpu.CompilerParams(dimension_semantics=("parallel",),
                              vmem_limit_bytes=_VMEM_LIMIT)

    def act_spec(feat):                   # streamed (b_tile, feat) activations
        return pl.BlockSpec((b_tile, feat), lambda i: (i, 0))

    def full_spec(shape):                 # tiny grid-resident parameters
        return pl.BlockSpec(shape, lambda i: (0, 0))

    def stats_out(feat):                  # per-tile (sum, sumsq) partials
        shape = jax.ShapeDtypeStruct((num_tiles * _STATS_ROWS, feat), f32)
        spec = pl.BlockSpec((_STATS_ROWS, feat), lambda i: (i, 0))
        return shape, spec

    # --- layer 1: Linear(21->20) + BN1 partial statistics -------------------
    st_shape, st_spec = stats_out(HID[0])
    p1, st1 = pl.pallas_call(
        _linear_stats_kernel,
        grid=grid,
        in_specs=[act_spec(IN_DIM), full_spec(w1.shape)],
        out_shape=(jax.ShapeDtypeStruct((b_pad, HID[0]), bf16), st_shape),
        out_specs=(act_spec(HID[0]), st_spec),
        compiler_params=cp,
        cost_estimate=pl.CostEstimate(
            flops=2 * b_pad * IN_DIM * 128, transcendentals=0,
            bytes_accessed=b_pad * (IN_DIM + HID[0]) * 2),
    )(xb, w1)
    s1, t1 = _fold_stats(st1, params["g1"], params["bt1"], batch)

    # --- layers 2 & 3: BN-apply + ReLU + Linear + next-BN statistics --------
    def mid_layer(p, scale, shift, w, f_in, f_out):
        o_shape, o_spec = stats_out(f_out)
        kern = functools.partial(_bn_relu_linear_stats_kernel,
                                 b_tile=b_tile, batch=batch)
        return pl.pallas_call(
            kern,
            grid=grid,
            in_specs=[act_spec(f_in), full_spec(scale.shape),
                      full_spec(shift.shape), full_spec(w.shape)],
            out_shape=(jax.ShapeDtypeStruct((b_pad, f_out), bf16), o_shape),
            out_specs=(act_spec(f_out), o_spec),
            compiler_params=cp,
            cost_estimate=pl.CostEstimate(
                flops=2 * b_pad * f_in * 128, transcendentals=0,
                bytes_accessed=b_pad * (f_in + f_out) * 2),
        )(p, scale, shift, w)

    p2, st2 = mid_layer(p1, s1, t1, w2, HID[0], HID[1])
    s2, t2 = _fold_stats(st2, params["g2"], params["bt2"], batch)

    p3, st3 = mid_layer(p2, s2, t2, w3, HID[1], HID[2])
    s3, t3 = _fold_stats(st3, params["g3"], params["bt3"], batch)

    # --- layer 4: BN3-apply + ReLU + Linear(5->1) ----------------------------
    y = pl.pallas_call(
        _bn_relu_head_kernel,
        grid=grid,
        in_specs=[act_spec(HID[2]), full_spec(s3.shape), full_spec(t3.shape),
                  full_spec(w4_row.shape), full_spec(b4.shape)],
        out_shape=jax.ShapeDtypeStruct((b_pad, 1), f32),
        out_specs=act_spec(1),
        compiler_params=cp,
        cost_estimate=pl.CostEstimate(
            flops=2 * b_pad * HID[2], transcendentals=0,
            bytes_accessed=b_pad * (HID[2] * 2 + 4)),
    )(p3, s3, t3, w4_row, b4)

    return y[:batch]


# -----------------------------------------------------------------------------
# Parameters / reference / demo
# -----------------------------------------------------------------------------
def init_params(key):
    """Deterministic synthetic parameters matching the PyTorch module shapes.
    b1..b3 mirror torch.nn.Linear but are inert under train-mode BatchNorm."""
    dims = [(IN_DIM, 20), (20, 10), (10, 5), (5, 1)]
    params = {}
    keys = jax.random.split(key, 8)
    for i, (fan_in, fan_out) in enumerate(dims, start=1):
        bound = 1.0 / (fan_in ** 0.5)
        params[f"w{i}"] = jax.random.uniform(
            keys[2 * (i - 1)], (fan_in, fan_out), jnp.float32, -bound, bound)
        params[f"b{i}"] = jax.random.uniform(
            keys[2 * (i - 1) + 1], (1, fan_out), jnp.float32, -bound, bound)
    for i, f in zip((1, 2, 3), HID):
        params[f"g{i}"] = jnp.ones((1, f), jnp.float32)
        params[f"bt{i}"] = jnp.zeros((1, f), jnp.float32)
    return params


def generator_reference(x, params):
    """Pure-JAX f32 reference matching the PyTorch module in train mode."""
    def bn(h, g, b):
        mean = jnp.mean(h, axis=0, keepdims=True)
        var = jnp.mean(jnp.square(h - mean), axis=0, keepdims=True)
        return (h - mean) * jax.lax.rsqrt(var + BN_EPS) * g + b

    h = x @ params["w1"] + params["b1"]
    h = jnp.maximum(bn(h, params["g1"], params["bt1"]), 0.0)
    h = h @ params["w2"] + params["b2"]
    h = jnp.maximum(bn(h, params["g2"], params["bt2"]), 0.0)
    h = h @ params["w3"] + params["b3"]
    h = jnp.maximum(bn(h, params["g3"], params["bt3"]), 0.0)
    return h @ params["w4"] + params["b4"]


if __name__ == "__main__":
    key = jax.random.PRNGKey(0)
    k_x, k_p = jax.random.split(key)

    batch = 250     # deliberately not a multiple of the tile: exercises batch
                    # padding and the in-kernel BN-statistics row mask
    x = jax.random.normal(k_x, (batch, IN_DIM), jnp.float32)
    params = init_params(k_p)

    out = jax.jit(generator_forward)(x, params)
    out = jax.block_until_ready(out)
    assert out.shape == (batch, 1), out.shape
    assert bool(jnp.all(jnp.isfinite(out)))

    ref = generator_reference(x, params)
    err = float(jnp.max(jnp.abs(out - ref)))
    # bf16 MXU operands / bf16 inter-layer storage bound the error;
    # exact-f32 PyTorch bitwise parity is not expected.
    assert bool(jnp.allclose(out, ref, atol=5e-2, rtol=5e-2)), err

    print("KERNEL_OK")
</pallas_src>

<mosaic_0001>
module attributes {stable_mosaic.version = 11 : i64} {
  func.func @_linear_stats_kernel(%arg0: i32, %arg1: memref<64x21xbf16, #tpu.memory_space<vmem>>, %arg2: memref<21x20xbf16, #tpu.memory_space<vmem>>, %arg3: memref<64x20xbf16, #tpu.memory_space<vmem>>, %arg4: memref<8x20xf32, #tpu.memory_space<vmem>>) attributes {dimension_semantics = [#tpu.dimension_semantics<parallel>], iteration_bounds = array<i64: 4>, scalar_prefetch = 0 : i64, scratch_operands = 0 : i64, tpu.core_type = #tpu.core_type<tc>, window_params = [{transform_indices = @transform_0, window_bounds = array<i64: 64, 21>}, {pipeline_mode = #tpu.pipeline_mode<synchronous>, transform_indices = @transform_1, window_bounds = array<i64: 21, 20>}, {transform_indices = @transform_2, window_bounds = array<i64: 64, 20>}, {transform_indices = @transform_3, window_bounds = array<i64: 8, 20>}]} {
    %c0 = arith.constant 0 : index
    %c0_0 = arith.constant 0 : index
    %0 = vector.load %arg1[%c0, %c0_0] : memref<64x21xbf16, #tpu.memory_space<vmem>>, vector<64x21xbf16>
    %c0_1 = arith.constant 0 : index
    %c0_2 = arith.constant 0 : index
    %1 = vector.load %arg2[%c0_1, %c0_2] : memref<21x20xbf16, #tpu.memory_space<vmem>>, vector<21x20xbf16>
    %cst = arith.constant dense<0.000000e+00> : vector<64x20xf32>
    %2 = tpu.matmul %0, %1, %cst {dimension_numbers = #tpu.dot_dimension_numbers<[1], [0], [0], [1], [0, 0, 1, 1], [], []>} : vector<64x21xbf16>, vector<21x20xbf16>, vector<64x20xf32> -> vector<64x20xf32>
    %3 = arith.truncf %2 : vector<64x20xf32> to vector<64x20xbf16>
    %c0_3 = arith.constant 0 : index
    %c0_4 = arith.constant 0 : index
    %4 = vector.load %arg3[%c0_3, %c0_4] : memref<64x20xbf16, #tpu.memory_space<vmem>>, vector<64x20xbf16>
    tpu.vector_store %arg3[%c0_3, %c0_4], %3 {strides = array<i32>} : memref<64x20xbf16, #tpu.memory_space<vmem>>, vector<64x20xbf16>,
    %cst_5 = arith.constant dense<0.000000e+00> : vector<20xf32>
    %5 = vector.multi_reduction <add>, %2, %cst_5 [0] : vector<64x20xf32> to vector<20xf32>
    %6 = vector.shape_cast %5 : vector<20xf32> to vector<1x20xf32>
    %7 = arith.mulf %2, %2 : vector<64x20xf32>
    %cst_6 = arith.constant dense<0.000000e+00> : vector<20xf32>
    %8 = vector.multi_reduction <add>, %7, %cst_6 [0] : vector<64x20xf32> to vector<20xf32>
    %9 = vector.shape_cast %8 : vector<20xf32> to vector<1x20xf32>
    %cst_7 = arith.constant 0.000000e+00 : f32
    %10 = vector.broadcast %cst_7 : f32 to vector<6x20xf32>
    %11 = tpu.concatenate %6, %9, %10 in 0 : vector<1x20xf32>, vector<1x20xf32>, vector<6x20xf32> -> vector<8x20xf32>
    %c0_8 = arith.constant 0 : index
    %c0_9 = arith.constant 0 : index
    %12 = vector.load %arg4[%c0_8, %c0_9] : memref<8x20xf32, #tpu.memory_space<vmem>>, vector<8x20xf32>
    tpu.vector_store %arg4[%c0_8, %c0_9], %11 {strides = array<i32>} : memref<8x20xf32, #tpu.memory_space<vmem>>, vector<8x20xf32>,
    return
  }
  func.func @transform_0(%arg0: i32) -> (i32, i32) {
    %c0_i32 = arith.constant 0 : i32
    %c0_i32_0 = arith.constant 0 : i32
    return %arg0, %c0_i32 : i32, i32
  }
  func.func @transform_1(%arg0: i32) -> (i32, i32) {
    %c0_i32 = arith.constant 0 : i32
    %c0_i32_0 = arith.constant 0 : i32
    %c0_i32_1 = arith.constant 0 : i32
    return %c0_i32, %c0_i32_0 : i32, i32
  }
  func.func @transform_2(%arg0: i32) -> (i32, i32) {
    %c0_i32 = arith.constant 0 : i32
    %c0_i32_0 = arith.constant 0 : i32
    return %arg0, %c0_i32 : i32, i32
  }
  func.func @transform_3(%arg0: i32) -> (i32, i32) {
    %c0_i32 = arith.constant 0 : i32
    %c0_i32_0 = arith.constant 0 : i32
    return %arg0, %c0_i32 : i32, i32
  }
}

module attributes {stable_mosaic.version = 11 : i64} {
  func.func @_bn_relu_linear_stats_kernel(%arg0: i32, %arg1: memref<64x20xbf16, #tpu.memory_space<vmem>>, %arg2: memref<1x20xf32, #tpu.memory_space<vmem>>, %arg3: memref<1x20xf32, #tpu.memory_space<vmem>>, %arg4: memref<20x10xbf16, #tpu.memory_space<vmem>>, %arg5: memref<64x10xbf16, #tpu.memory_space<vmem>>, %arg6: memref<8x10xf32, #tpu.memory_space<vmem>>) attributes {dimension_semantics = [#tpu.dimension_semantics<parallel>], iteration_bounds = array<i64: 4>, scalar_prefetch = 0 : i64, scratch_operands = 0 : i64, tpu.core_type = #tpu.core_type<tc>, window_params = [{transform_indices = @transform_0, window_bounds = array<i64: 64, 20>}, {pipeline_mode = #tpu.pipeline_mode<synchronous>, transform_indices = @transform_1, window_bounds = array<i64: 1, 20>}, {pipeline_mode = #tpu.pipeline_mode<synchronous>, transform_indices = @transform_2, window_bounds = array<i64: 1, 20>}, {pipeline_mode = #tpu.pipeline_mode<synchronous>, transform_indices = @transform_3, window_bounds = array<i64: 20, 10>}, {transform_indices = @transform_4, window_bounds = array<i64: 64, 10>}, {transform_indices = @transform_5, window_bounds = array<i64: 8, 10>}]} {
    %c0 = arith.constant 0 : index
    %c0_0 = arith.constant 0 : index
    %0 = vector.load %arg1[%c0, %c0_0] : memref<64x20xbf16, #tpu.memory_space<vmem>>, vector<64x20xbf16>
    %1 = arith.extf %0 : vector<64x20xbf16> to vector<64x20xf32>
    %c0_1 = arith.constant 0 : index
    %c0_2 = arith.constant 0 : index
    %2 = vector.load %arg2[%c0_1, %c0_2] : memref<1x20xf32, #tpu.memory_space<vmem>>, vector<1x20xf32>
    %3 = vector.broadcast %2 : vector<1x20xf32> to vector<64x20xf32>
    %4 = arith.mulf %1, %3 : vector<64x20xf32>
    %c0_3 = arith.constant 0 : index
    %c0_4 = arith.constant 0 : index
    %5 = vector.load %arg3[%c0_3, %c0_4] : memref<1x20xf32, #tpu.memory_space<vmem>>, vector<1x20xf32>
    %6 = vector.broadcast %5 : vector<1x20xf32> to vector<64x20xf32>
    %7 = arith.addf %4, %6 : vector<64x20xf32>
    %cst = arith.constant 0.000000e+00 : f32
    %8 = vector.broadcast %cst : f32 to vector<64x20xf32>
    %9 = arith.maximumf %7, %8 : vector<64x20xf32>
    %10 = tpu.iota {dimensions = array<i32: 0>} : vector<64x20xi32>
    %c64_i32 = arith.constant 64 : i32
    %11 = arith.muli %arg0, %c64_i32 : i32
    %12 = vector.broadcast %11 : i32 to vector<64x20xi32>
    %13 = arith.addi %10, %12 : vector<64x20xi32>
    %c250_i32 = arith.constant 250 : i32
    %14 = vector.broadcast %c250_i32 : i32 to vector<64x20xi32>
    %15 = arith.cmpi slt, %13, %14 : vector<64x20xi32>
    %cst_5 = arith.constant 0.000000e+00 : f32
    %16 = vector.broadcast %cst_5 : f32 to vector<64x20xf32>
    %17 = arith.select %15, %9, %16 : vector<64x20xi1>, vector<64x20xf32>
    %18 = arith.truncf %17 : vector<64x20xf32> to vector<64x20xbf16>
    %c0_6 = arith.constant 0 : index
    %c0_7 = arith.constant 0 : index
    %19 = vector.load %arg4[%c0_6, %c0_7] : memref<20x10xbf16, #tpu.memory_space<vmem>>, vector<20x10xbf16>
    %cst_8 = arith.constant dense<0.000000e+00> : vector<64x10xf32>
    %20 = tpu.matmul %18, %19, %cst_8 {dimension_numbers = #tpu.dot_dimension_numbers<[1], [0], [0], [1], [0, 0, 1, 1], [], []>} : vector<64x20xbf16>, vector<20x10xbf16>, vector<64x10xf32> -> vector<64x10xf32>
    %21 = arith.truncf %20 : vector<64x10xf32> to vector<64x10xbf16>
    %c0_9 = arith.constant 0 : index
    %c0_10 = arith.constant 0 : index
    %22 = vector.load %arg5[%c0_9, %c0_10] : memref<64x10xbf16, #tpu.memory_space<vmem>>, vector<64x10xbf16>
    tpu.vector_store %arg5[%c0_9, %c0_10], %21 {strides = array<i32>} : memref<64x10xbf16, #tpu.memory_space<vmem>>, vector<64x10xbf16>,
    %cst_11 = arith.constant dense<0.000000e+00> : vector<10xf32>
    %23 = vector.multi_reduction <add>, %20, %cst_11 [0] : vector<64x10xf32> to vector<10xf32>
    %24 = vector.shape_cast %23 : vector<10xf32> to vector<1x10xf32>
    %25 = arith.mulf %20, %20 : vector<64x10xf32>
    %cst_12 = arith.constant dense<0.000000e+00> : vector<10xf32>
    %26 = vector.multi_reduction <add>, %25, %cst_12 [0] : vector<64x10xf32> to vector<10xf32>
    %27 = vector.shape_cast %26 : vector<10xf32> to vector<1x10xf32>
    %cst_13 = arith.constant 0.000000e+00 : f32
    %28 = vector.broadcast %cst_13 : f32 to vector<6x10xf32>
    %29 = tpu.concatenate %24, %27, %28 in 0 : vector<1x10xf32>, vector<1x10xf32>, vector<6x10xf32> -> vector<8x10xf32>
    %c0_14 = arith.constant 0 : index
    %c0_15 = arith.constant 0 : index
    %30 = vector.load %arg6[%c0_14, %c0_15] : memref<8x10xf32, #tpu.memory_space<vmem>>, vector<8x10xf32>
    tpu.vector_store %arg6[%c0_14, %c0_15], %29 {strides = array<i32>} : memref<8x10xf32, #tpu.memory_space<vmem>>, vector<8x10xf32>,
    return
  }
  func.func @transform_0(%arg0: i32) -> (i32, i32) {
    %c0_i32 = arith.constant 0 : i32
    %c0_i32_0 = arith.constant 0 : i32
    return %arg0, %c0_i32 : i32, i32
  }
  func.func @transform_1(%arg0: i32) -> (i32, i32) {
    %c0_i32 = arith.constant 0 : i32
    %c0_i32_0 = arith.constant 0 : i32
    %c0_i32_1 = arith.constant 0 : i32
    return %c0_i32, %c0_i32_0 : i32, i32
  }
  func.func @transform_2(%arg0: i32) -> (i32, i32) {
    %c0_i32 = arith.constant 0 : i32
    %c0_i32_0 = arith.constant 0 : i32
    %c0_i32_1 = arith.constant 0 : i32
    return %c0_i32, %c0_i32_0 : i32, i32
  }
  func.func @transform_3(%arg0: i32) -> (i32, i32) {
    %c0_i32 = arith.constant 0 : i32
    %c0_i32_0 = arith.constant 0 : i32
    %c0_i32_1 = arith.constant 0 : i32
    return %c0_i32, %c0_i32_0 : i32, i32
  }
  func.func @transform_4(%arg0: i32) -> (i32, i32) {
    %c0_i32 = arith.constant 0 : i32
    %c0_i32_0 = arith.constant 0 : i32
    return %arg0, %c0_i32 : i32, i32
  }
  func.func @transform_5(%arg0: i32) -> (i32, i32) {
    %c0_i32 = arith.constant 0 : i32
    %c0_i32_0 = arith.constant 0 : i32
    return %arg0, %c0_i32 : i32, i32
  }
}

module attributes {stable_mosaic.version = 11 : i64} {
  func.func @_bn_relu_linear_stats_kernel(%arg0: i32, %arg1: memref<64x10xbf16, #tpu.memory_space<vmem>>, %arg2: memref<1x10xf32, #tpu.memory_space<vmem>>, %arg3: memref<1x10xf32, #tpu.memory_space<vmem>>, %arg4: memref<10x5xbf16, #tpu.memory_space<vmem>>, %arg5: memref<64x5xbf16, #tpu.memory_space<vmem>>, %arg6: memref<8x5xf32, #tpu.memory_space<vmem>>) attributes {dimension_semantics = [#tpu.dimension_semantics<parallel>], iteration_bounds = array<i64: 4>, scalar_prefetch = 0 : i64, scratch_operands = 0 : i64, tpu.core_type = #tpu.core_type<tc>, window_params = [{transform_indices = @transform_0, window_bounds = array<i64: 64, 10>}, {pipeline_mode = #tpu.pipeline_mode<synchronous>, transform_indices = @transform_1, window_bounds = array<i64: 1, 10>}, {pipeline_mode = #tpu.pipeline_mode<synchronous>, transform_indices = @transform_2, window_bounds = array<i64: 1, 10>}, {pipeline_mode = #tpu.pipeline_mode<synchronous>, transform_indices = @transform_3, window_bounds = array<i64: 10, 5>}, {transform_indices = @transform_4, window_bounds = array<i64: 64, 5>}, {transform_indices = @transform_5, window_bounds = array<i64: 8, 5>}]} {
    %c0 = arith.constant 0 : index
    %c0_0 = arith.constant 0 : index
    %0 = vector.load %arg1[%c0, %c0_0] : memref<64x10xbf16, #tpu.memory_space<vmem>>, vector<64x10xbf16>
    %1 = arith.extf %0 : vector<64x10xbf16> to vector<64x10xf32>
    %c0_1 = arith.constant 0 : index
    %c0_2 = arith.constant 0 : index
    %2 = vector.load %arg2[%c0_1, %c0_2] : memref<1x10xf32, #tpu.memory_space<vmem>>, vector<1x10xf32>
    %3 = vector.broadcast %2 : vector<1x10xf32> to vector<64x10xf32>
    %4 = arith.mulf %1, %3 : vector<64x10xf32>
    %c0_3 = arith.constant 0 : index
    %c0_4 = arith.constant 0 : index
    %5 = vector.load %arg3[%c0_3, %c0_4] : memref<1x10xf32, #tpu.memory_space<vmem>>, vector<1x10xf32>
    %6 = vector.broadcast %5 : vector<1x10xf32> to vector<64x10xf32>
    %7 = arith.addf %4, %6 : vector<64x10xf32>
    %cst = arith.constant 0.000000e+00 : f32
    %8 = vector.broadcast %cst : f32 to vector<64x10xf32>
    %9 = arith.maximumf %7, %8 : vector<64x10xf32>
    %10 = tpu.iota {dimensions = array<i32: 0>} : vector<64x10xi32>
    %c64_i32 = arith.constant 64 : i32
    %11 = arith.muli %arg0, %c64_i32 : i32
    %12 = vector.broadcast %11 : i32 to vector<64x10xi32>
    %13 = arith.addi %10, %12 : vector<64x10xi32>
    %c250_i32 = arith.constant 250 : i32
    %14 = vector.broadcast %c250_i32 : i32 to vector<64x10xi32>
    %15 = arith.cmpi slt, %13, %14 : vector<64x10xi32>
    %cst_5 = arith.constant 0.000000e+00 : f32
    %16 = vector.broadcast %cst_5 : f32 to vector<64x10xf32>
    %17 = arith.select %15, %9, %16 : vector<64x10xi1>, vector<64x10xf32>
    %18 = arith.truncf %17 : vector<64x10xf32> to vector<64x10xbf16>
    %c0_6 = arith.constant 0 : index
    %c0_7 = arith.constant 0 : index
    %19 = vector.load %arg4[%c0_6, %c0_7] : memref<10x5xbf16, #tpu.memory_space<vmem>>, vector<10x5xbf16>
    %cst_8 = arith.constant dense<0.000000e+00> : vector<64x5xf32>
    %20 = tpu.matmul %18, %19, %cst_8 {dimension_numbers = #tpu.dot_dimension_numbers<[1], [0], [0], [1], [0, 0, 1, 1], [], []>} : vector<64x10xbf16>, vector<10x5xbf16>, vector<64x5xf32> -> vector<64x5xf32>
    %21 = arith.truncf %20 : vector<64x5xf32> to vector<64x5xbf16>
    %c0_9 = arith.constant 0 : index
    %c0_10 = arith.constant 0 : index
    %22 = vector.load %arg5[%c0_9, %c0_10] : memref<64x5xbf16, #tpu.memory_space<vmem>>, vector<64x5xbf16>
    tpu.vector_store %arg5[%c0_9, %c0_10], %21 {strides = array<i32>} : memref<64x5xbf16, #tpu.memory_space<vmem>>, vector<64x5xbf16>,
    %cst_11 = arith.constant dense<0.000000e+00> : vector<5xf32>
    %23 = vector.multi_reduction <add>, %20, %cst_11 [0] : vector<64x5xf32> to vector<5xf32>
    %24 = vector.shape_cast %23 : vector<5xf32> to vector<1x5xf32>
    %25 = arith.mulf %20, %20 : vector<64x5xf32>
    %cst_12 = arith.constant dense<0.000000e+00> : vector<5xf32>
    %26 = vector.multi_reduction <add>, %25, %cst_12 [0] : vector<64x5xf32> to vector<5xf32>
    %27 = vector.shape_cast %26 : vector<5xf32> to vector<1x5xf32>
    %cst_13 = arith.constant 0.000000e+00 : f32
    %28 = vector.broadcast %cst_13 : f32 to vector<6x5xf32>
    %29 = tpu.concatenate %24, %27, %28 in 0 : vector<1x5xf32>, vector<1x5xf32>, vector<6x5xf32> -> vector<8x5xf32>
    %c0_14 = arith.constant 0 : index
    %c0_15 = arith.constant 0 : index
    %30 = vector.load %arg6[%c0_14, %c0_15] : memref<8x5xf32, #tpu.memory_space<vmem>>, vector<8x5xf32>
    tpu.vector_store %arg6[%c0_14, %c0_15], %29 {strides = array<i32>} : memref<8x5xf32, #tpu.memory_space<vmem>>, vector<8x5xf32>,
    return
  }
  func.func @transform_0(%arg0: i32) -> (i32, i32) {
    %c0_i32 = arith.constant 0 : i32
    %c0_i32_0 = arith.constant 0 : i32
    return %arg0, %c0_i32 : i32, i32
  }
  func.func @transform_1(%arg0: i32) -> (i32, i32) {
    %c0_i32 = arith.constant 0 : i32
    %c0_i32_0 = arith.constant 0 : i32
    %c0_i32_1 = arith.constant 0 : i32
    return %c0_i32, %c0_i32_0 : i32, i32
  }
  func.func @transform_2(%arg0: i32) -> (i32, i32) {
    %c0_i32 = arith.constant 0 : i32
    %c0_i32_0 = arith.constant 0 : i32
    %c0_i32_1 = arith.constant 0 : i32
    return %c0_i32, %c0_i32_0 : i32, i32
  }
  func.func @transform_3(%arg0: i32) -> (i32, i32) {
    %c0_i32 = arith.constant 0 : i32
    %c0_i32_0 = arith.constant 0 : i32
    %c0_i32_1 = arith.constant 0 : i32
    return %c0_i32, %c0_i32_0 : i32, i32
  }
  func.func @transform_4(%arg0: i32) -> (i32, i32) {
    %c0_i32 = arith.constant 0 : i32
    %c0_i32_0 = arith.constant 0 : i32
    return %arg0, %c0_i32 : i32, i32
  }
  func.func @transform_5(%arg0: i32) -> (i32, i32) {
    %c0_i32 = arith.constant 0 : i32
    %c0_i32_0 = arith.constant 0 : i32
    return %arg0, %c0_i32 : i32, i32
  }
}

module attributes {stable_mosaic.version = 11 : i64} {
  func.func @_bn_relu_head_kernel(%arg0: i32, %arg1: memref<64x5xbf16, #tpu.memory_space<vmem>>, %arg2: memref<1x5xf32, #tpu.memory_space<vmem>>, %arg3: memref<1x5xf32, #tpu.memory_space<vmem>>, %arg4: memref<1x5xf32, #tpu.memory_space<vmem>>, %arg5: memref<1x1xf32, #tpu.memory_space<vmem>>, %arg6: memref<64x1xf32, #tpu.memory_space<vmem>>) attributes {dimension_semantics = [#tpu.dimension_semantics<parallel>], iteration_bounds = array<i64: 4>, scalar_prefetch = 0 : i64, scratch_operands = 0 : i64, tpu.core_type = #tpu.core_type<tc>, window_params = [{transform_indices = @transform_0, window_bounds = array<i64: 64, 5>}, {pipeline_mode = #tpu.pipeline_mode<synchronous>, transform_indices = @transform_1, window_bounds = array<i64: 1, 5>}, {pipeline_mode = #tpu.pipeline_mode<synchronous>, transform_indices = @transform_2, window_bounds = array<i64: 1, 5>}, {pipeline_mode = #tpu.pipeline_mode<synchronous>, transform_indices = @transform_3, window_bounds = array<i64: 1, 5>}, {pipeline_mode = #tpu.pipeline_mode<synchronous>, transform_indices = @transform_4, window_bounds = array<i64: 1, 1>}, {transform_indices = @transform_5, window_bounds = array<i64: 64, 1>}]} {
    %c0 = arith.constant 0 : index
    %c0_0 = arith.constant 0 : index
    %0 = vector.load %arg1[%c0, %c0_0] : memref<64x5xbf16, #tpu.memory_space<vmem>>, vector<64x5xbf16>
    %1 = arith.extf %0 : vector<64x5xbf16> to vector<64x5xf32>
    %c0_1 = arith.constant 0 : index
    %c0_2 = arith.constant 0 : index
    %2 = vector.load %arg2[%c0_1, %c0_2] : memref<1x5xf32, #tpu.memory_space<vmem>>, vector<1x5xf32>
    %3 = vector.broadcast %2 : vector<1x5xf32> to vector<64x5xf32>
    %4 = arith.mulf %1, %3 : vector<64x5xf32>
    %c0_3 = arith.constant 0 : index
    %c0_4 = arith.constant 0 : index
    %5 = vector.load %arg3[%c0_3, %c0_4] : memref<1x5xf32, #tpu.memory_space<vmem>>, vector<1x5xf32>
    %6 = vector.broadcast %5 : vector<1x5xf32> to vector<64x5xf32>
    %7 = arith.addf %4, %6 : vector<64x5xf32>
    %cst = arith.constant 0.000000e+00 : f32
    %8 = vector.broadcast %cst : f32 to vector<64x5xf32>
    %9 = arith.maximumf %7, %8 : vector<64x5xf32>
    %c0_5 = arith.constant 0 : index
    %c0_6 = arith.constant 0 : index
    %10 = vector.load %arg4[%c0_5, %c0_6] : memref<1x5xf32, #tpu.memory_space<vmem>>, vector<1x5xf32>
    %11 = vector.broadcast %10 : vector<1x5xf32> to vector<64x5xf32>
    %12 = arith.mulf %9, %11 : vector<64x5xf32>
    %cst_7 = arith.constant dense<0.000000e+00> : vector<64xf32>
    %13 = vector.multi_reduction <add>, %12, %cst_7 [1] : vector<64x5xf32> to vector<64xf32>
    %14 = vector.shape_cast %13 : vector<64xf32> to vector<64x1xf32>
    %c0_8 = arith.constant 0 : index
    %c0_9 = arith.constant 0 : index
    %15 = vector.load %arg5[%c0_8, %c0_9] : memref<1x1xf32, #tpu.memory_space<vmem>>, vector<1x1xf32>
    %16 = vector.broadcast %15 : vector<1x1xf32> to vector<64x1xf32>
    %17 = arith.addf %14, %16 : vector<64x1xf32>
    %c0_10 = arith.constant 0 : index
    %c0_11 = arith.constant 0 : index
    %18 = vector.load %arg6[%c0_10, %c0_11] : memref<64x1xf32, #tpu.memory_space<vmem>>, vector<64x1xf32>
    tpu.vector_store %arg6[%c0_10, %c0_11], %17 {strides = array<i32>} : memref<64x1xf32, #tpu.memory_space<vmem>>, vector<64x1xf32>,
    return
  }
  func.func @transform_0(%arg0: i32) -> (i32, i32) {
    %c0_i32 = arith.constant 0 : i32
    %c0_i32_0 = arith.constant 0 : i32
    return %arg0, %c0_i32 : i32, i32
  }
  func.func @transform_1(%arg0: i32) -> (i32, i32) {
    %c0_i32 = arith.constant 0 : i32
    %c0_i32_0 = arith.constant 0 : i32
    %c0_i32_1 = arith.constant 0 : i32
    return %c0_i32, %c0_i32_0 : i32, i32
  }
  func.func @transform_2(%arg0: i32) -> (i32, i32) {
    %c0_i32 = arith.constant 0 : i32
    %c0_i32_0 = arith.constant 0 : i32
    %c0_i32_1 = arith.constant 0 : i32
    return %c0_i32, %c0_i32_0 : i32, i32
  }
  func.func @transform_3(%arg0: i32) -> (i32, i32) {
    %c0_i32 = arith.constant 0 : i32
    %c0_i32_0 = arith.constant 0 : i32
    %c0_i32_1 = arith.constant 0 : i32
    return %c0_i32, %c0_i32_0 : i32, i32
  }
  func.func @transform_4(%arg0: i32) -> (i32, i32) {
    %c0_i32 = arith.constant 0 : i32
    %c0_i32_0 = arith.constant 0 : i32
    %c0_i32_1 = arith.constant 0 : i32
    return %c0_i32, %c0_i32_0 : i32, i32
  }
  func.func @transform_5(%arg0: i32) -> (i32, i32) {
    %c0_i32 = arith.constant 0 : i32
    %c0_i32_0 = arith.constant 0 : i32
    return %arg0, %c0_i32 : i32, i32
  }
}

</mosaic_0001>

<llo_original>
// kernel: generator_forward.5
$region0: #{generator_forward.5}
  #allocation0 [shape = 'u32[]', space=smem, size = 0x4, offset = 0x4, fixed_abs, tag = 'smem constant byte address 0x4 - core index']
  #allocation1 [shape = 'u32[144,128]{1,0:T(1,128)}', space=vmem, size = 0x12000, scoped, tag = 'internal scratch']
  %s0 = inlined_call_operand.vmem [shape: bf16[256,20], index: 0, kind: input, shape index: {}]
  %s1 = inlined_call_operand.vmem [shape: f32[1,20], index: 1, kind: input, shape index: {}]
  %s2 = inlined_call_operand.vmem [shape: f32[1,20], index: 2, kind: input, shape index: {}]
  %s3 = inlined_call_operand.vmem [shape: bf16[20,10], index: 3, kind: input, shape index: {}]
  %s4 = inlined_call_operand.vmem [shape: bf16[256,10], index: 4, kind: output, shape index: {0}]
  %s5 = inlined_call_operand.vmem [shape: f32[32,10], index: 5, kind: output, shape index: {1}]
  %6 = xla_tuple %s4, %s5
  %s7 = sld [smem:[#allocation0]]
  $region57: #{generator_forward.5} parent=0
    _
  %s9 = ssub.s32 1, %s7
  %s10 = scalar_select 0, %s9, %s7
  loop: start=0, step=1, limit=6
  $region2: #{generator_forward.5} parent=0 // loop_pre_header
    _
  $region3: #{generator_forward.5} parent=0 // loop_header
    %s12 = sphi 0, %s16
    %p13 = scmp.ge.s32.totalorder %s12, 6
    %s22 = sphi 0, %s24
    %s25 = sphi 0, %s22
    %s26 = sphi 0, %s25
    %s42 = sphi 0, %s26
    %s46 = sphi 0, %s46
    %s48 = sphi 0, %s46
    %s49 = sphi 0, %s48
    %s63 = sphi 0, %s49
    %s67 = sphi 0, %s67
    %s69 = sphi 0, %s67
    %s70 = sphi 0, %s69
    %s84 = sphi 0, %s70
    %s88 = sphi 0, %s88
    %s90 = sphi 0, %s88
    %s91 = sphi 0, %s90
    %s105 = sphi 0, %s91
    %s111 = sphi 0, %s113
    %s114 = sphi 0, %s111
    %s115 = sphi 0, %s114
    %s131 = sphi 0, %s115
    %s137 = sphi 0, %s139
    %s140 = sphi 0, %s137
    %s141 = sphi 0, %s140
    %s157 = sphi 0, %s141
  $region4: #{generator_forward.5} parent=0 // loop_header_branch
    %15 = sbr.rel (%p13) target = $region8
  $region5: #{generator_forward.5} parent=0 // loop_body
    %s17 = ssub.s32 %s12, 1
    %s18 = ssub.s32 %s12, 2
    %s19 = sadd.s32 %s12, 1
    %s20 = ssub.s32 %s12, %s19
    %p21 = scmp.eq.s32.totalorder %s20, 0
    %s23 = sadd.s32 %s22, 1
    %s24 = scalar_select %p21, %s22, %s23
    %p27 = pneg %p21
    %p28 = scmp.eq.s32.totalorder %s12, 3
    %p29 = por %p27, %p28
    %p30 = scmp.ne.s32.totalorder %s22, %s25
    %p31 = scmp.eq.s32.totalorder %s12, 0
    %p32 = por %p30, %p31
    %p33 = scmp.ne.s32.totalorder %s22, %s25
    %p34 = scmp.eq.s32.totalorder %s17, 3
    %p35 = por %p33, %p34
    %p36 = scmp.ne.s32.totalorder %s25, %s26
    %p37 = scmp.eq.s32.totalorder %s17, 0
    %p38 = por %p36, %p37
    %p39 = scmp.ne.s32.totalorder %s25, %s26
    %p40 = scmp.eq.s32.totalorder %s18, 3
    %p41 = por %p39, %p40
    %p43 = scmp.ne.s32.totalorder %s26, %s42
    %p44 = scmp.eq.s32.totalorder %s18, 0
    %p45 = por %p43, %p44
    %s47 = sadd.s32 %s46, 1
    %p50 = scmp.eq.s32.totalorder %s12, 3
    %p51 = scmp.ne.s32.totalorder %s46, %s48
    %p52 = scmp.eq.s32.totalorder %s12, 0
    %p53 = por %p51, %p52
    %p54 = scmp.ne.s32.totalorder %s46, %s48
    %p55 = scmp.eq.s32.totalorder %s17, 3
    %p56 = por %p54, %p55
    %p57 = scmp.ne.s32.totalorder %s48, %s49
    %p58 = scmp.eq.s32.totalorder %s17, 0
    %p59 = por %p57, %p58
    %p60 = scmp.ne.s32.totalorder %s48, %s49
    %p61 = scmp.eq.s32.totalorder %s18, 3
    %p62 = por %p60, %p61
    %p64 = scmp.ne.s32.totalorder %s49, %s63
    %p65 = scmp.eq.s32.totalorder %s18, 0
    %p66 = por %p64, %p65
    %s68 = sadd.s32 %s67, 1
    %p71 = scmp.eq.s32.totalorder %s12, 3
    %p72 = scmp.ne.s32.totalorder %s67, %s69
    %p73 = scmp.eq.s32.totalorder %s12, 0
    %p74 = por %p72, %p73
    %p75 = scmp.ne.s32.totalorder %s67, %s69
    %p76 = scmp.eq.s32.totalorder %s17, 3
    %p77 = por %p75, %p76
    %p78 = scmp.ne.s32.totalorder %s69, %s70
    %p79 = scmp.eq.s32.totalorder %s17, 0
    %p80 = por %p78, %p79
    %p81 = scmp.ne.s32.totalorder %s69, %s70
    %p82 = scmp.eq.s32.totalorder %s18, 3
    %p83 = por %p81, %p82
    %p85 = scmp.ne.s32.totalorder %s70, %s84
    %p86 = scmp.eq.s32.totalorder %s18, 0
    %p87 = por %p85, %p86
    %s89 = sadd.s32 %s88, 1
    %p92 = scmp.eq.s32.totalorder %s12, 3
    %p93 = scmp.ne.s32.totalorder %s88, %s90
    %p94 = scmp.eq.s32.totalorder %s12, 0
    %p95 = por %p93, %p94
    %p96 = scmp.ne.s32.totalorder %s88, %s90
    %p97 = scmp.eq.s32.totalorder %s17, 3
    %p98 = por %p96, %p97
    %p99 = scmp.ne.s32.totalorder %s90, %s91
    %p100 = scmp.eq.s32.totalorder %s17, 0
    %p101 = por %p99, %p100
    %p102 = scmp.ne.s32.totalorder %s90, %s91
    %p103 = scmp.eq.s32.totalorder %s18, 3
    %p104 = por %p102, %p103
    %p106 = scmp.ne.s32.totalorder %s91, %s105
    %p107 = scmp.eq.s32.totalorder %s18, 0
    %p108 = por %p106, %p107
    %s109 = ssub.s32 %s12, %s19
    %p110 = scmp.eq.s32.totalorder %s109, 0
    %s112 = sadd.s32 %s111, 1
    %s113 = scalar_select %p110, %s111, %s112
    %p116 = pneg %p110
    %p117 = scmp.eq.s32.totalorder %s12, 3
    %p118 = por %p116, %p117
    %p119 = scmp.ne.s32.totalorder %s111, %s114
    %p120 = scmp.eq.s32.totalorder %s12, 0
    %p121 = por %p119, %p120
    %p122 = scmp.ne.s32.totalorder %s111, %s114
    %p123 = scmp.eq.s32.totalorder %s17, 3
    %p124 = por %p122, %p123
    %p125 = scmp.ne.s32.totalorder %s114, %s115
    %p126 = scmp.eq.s32.totalorder %s17, 0
    %p127 = por %p125, %p126
    %p128 = scmp.ne.s32.totalorder %s114, %s115
    %p129 = scmp.eq.s32.totalorder %s18, 3
    %p130 = por %p128, %p129
    %p132 = scmp.ne.s32.totalorder %s115, %s131
    %p133 = scmp.eq.s32.totalorder %s18, 0
    %p134 = por %p132, %p133
    %s135 = ssub.s32 %s12, %s19
    %p136 = scmp.eq.s32.totalorder %s135, 0
    %s138 = sadd.s32 %s137, 1
    %s139 = scalar_select %p136, %s137, %s138
    %p142 = pneg %p136
    %p143 = scmp.eq.s32.totalorder %s12, 3
    %p144 = por %p142, %p143
    %p145 = scmp.ne.s32.totalorder %s137, %s140
    %p146 = scmp.eq.s32.totalorder %s12, 0
    %p147 = por %p145, %p146
    %p148 = scmp.ne.s32.totalorder %s137, %s140
    %p149 = scmp.eq.s32.totalorder %s17, 3
    %p150 = por %p148, %p149
    %p151 = scmp.ne.s32.totalorder %s140, %s141
    %p152 = scmp.eq.s32.totalorder %s17, 0
    %p153 = por %p151, %p152
    %p154 = scmp.ne.s32.totalorder %s140, %s141
    %p155 = scmp.eq.s32.totalorder %s18, 3
    %p156 = por %p154, %p155
    %p158 = scmp.ne.s32.totalorder %s141, %s157
    %p159 = scmp.eq.s32.totalorder %s18, 0
    %p160 = por %p158, %p159
    %p161 = scmp.le.s32.totalorder 1, %s12
    %p162 = scmp.lt.s32.totalorder %s12, 5
    %p163 = pnand %p161, %p162
    %p164 = pneg %p163
    // Predicated region
    $region9: #{generator_forward.5} parent=5 // pred_check
      _
    $region10: #{generator_forward.5} parent=5 // pred_check_branch
      %166 = sbr.rel (%p163) target = $region12
    $region11: #{generator_forward.5} parent=5 // pred_region
      %s167 = ssub.s32 %s12, 1
      // Predicated region
      $region13: #{generator_forward.5} parent=11 // pred_check
        %p168 = pneg %p59
      $region14: #{generator_forward.5} parent=11 // pred_check_branch
        %170 = sbr.rel (%p168) target = $region16
      $region15: #{generator_forward.5} parent=11 // pred_region
        _
      $region16: #{generator_forward.5} parent=11 // pred_fallthru
        _
      // Predicated region
      $region17: #{generator_forward.5} parent=11 // pred_check
        %p171 = pneg %p80
      $region18: #{generator_forward.5} parent=11 // pred_check_branch
        %173 = sbr.rel (%p171) target = $region20
      $region19: #{generator_forward.5} parent=11 // pred_region
        _
      $region20: #{generator_forward.5} parent=11 // pred_fallthru
        _
      // Predicated region
      $region21: #{generator_forward.5} parent=11 // pred_check
        %p174 = pneg %p101
      $region22: #{generator_forward.5} parent=11 // pred_check_branch
        %176 = sbr.rel (%p174) target = $region24
      $region23: #{generator_forward.5} parent=11 // pred_region
        _
      $region24: #{generator_forward.5} parent=11 // pred_fallthru
        _
    $region12: #{generator_forward.5} parent=5 // pred_fallthru
      _
    %p177 = scmp.lt.s32.totalorder %s12, 4
    // Predicated region
    $region25: #{generator_forward.5} parent=5 // pred_check
      %p178 = pneg %p177
    $region26: #{generator_forward.5} parent=5 // pred_check_branch
      %180 = sbr.rel (%p178) target = $region28
    $region27: #{generator_forward.5} parent=5 // pred_region
      // Predicated region
      $region29: #{generator_forward.5} parent=27 // pred_check
        %p181 = pneg %p32
      $region30: #{generator_forward.5} parent=27 // pred_check_branch
        %183 = sbr.rel (%p181) target = $region32
      $region31: #{generator_forward.5} parent=27 // pred_region
        %s184 = smul.u32 8, %s12
        %p185 = scmp.lt.s32.totalorder %s184, 31
        %s186 = scalar_select %p185, %s184, 31
        %s187 = smul.addr %s186, 4
        %s188 = scalar_lea.vmem %s0, %s187
        %s189 = smul.u32 8, %s12
      $region32: #{generator_forward.5} parent=27 // pred_fallthru
        _
    $region28: #{generator_forward.5} parent=5 // pred_fallthru
      _
    %p190 = scmp.le.s32.totalorder 1, %s12
    %p191 = scmp.lt.s32.totalorder %s12, 5
    %p192 = pnand %p190, %p191
    %p193 = pneg %p192
    // Predicated region
    $region33: #{generator_forward.5} parent=5 // pred_check
      _
    $region34: #{generator_forward.5} parent=5 // pred_check_branch
      %195 = sbr.rel (%p192) target = $region36
    $region35: #{generator_forward.5} parent=5 // pred_region
      %s196 = ssub.s32 %s12, 1
      %s197 = smul.u32 8, %s17
      %p198 = scmp.lt.s32.totalorder %s197, 31
      %s199 = scalar_select %p198, %s197, 31
      %s200 = smul.addr %s199, 4
      %s201 = scalar_lea.vmem %s0, %s200
      %p202 = pneg %p38
      %p203 = pneg %p35
      %p204 = pneg %p59
      %p205 = pneg %p56
      %p206 = pneg %p80
      %p207 = pneg %p77
      %p208 = pneg %p101
      %p209 = pneg %p98
      %p210 = pneg %p127
      %p211 = pneg %p124
      %s212 = smul.u32 8, %s17
      %p213 = scmp.lt.s32.totalorder %s212, 31
      %s214 = scalar_select %p213, %s212, 31
      %s215 = smul.addr %s214, 4
      %s216 = scalar_lea.vmem %s4, %s215
      %p217 = pneg %p153
      %p218 = pneg %p150
      %p219 = scmp.lt.s32.totalorder %s17, 3
      %s220 = scalar_select %p219, %s17, 3
      %s221 = smul.addr %s220, 8
      %s222 = scalar_lea.vmem %s5, %s221
      %s223 = smul.u32 8, %s17
      %p224 = scmp.lt.s32.totalorder %s223, 31
      %s225 = scalar_select %p224, %s223, 31
      %s226 = smul.addr %s225, 4
      %s227 = scalar_lea.vmem %s0, %s226
      %s228 = smul.u32 8, %s17
      %s229 = smul.u32 8, %s17
      %p230 = scmp.lt.s32.totalorder %s229, 31
      %s231 = scalar_select %p230, %s229, 31
      %s232 = smul.addr %s231, 4
      %s233 = scalar_lea.vmem %s4, %s232
      %s234 = smul.u32 8, %s17
      %p235 = scmp.lt.s32.totalorder %s17, 3
      %s236 = scalar_select %p235, %s17, 3
      %s237 = smul.addr %s236, 8
      %s238 = scalar_lea.vmem %s5, %s237
      %v240 = vld [vmem:[%s227] sm:$0xf]
      %v241 = vld [vmem:[%s227 + $0x4] sm:$0xf]
      %v242 = vld [vmem:[%s227 + $0x8] sm:$0xf]
      %v243 = vld [vmem:[%s227 + $0xc] sm:$0xf]
      %v244 = vld [vmem:[%s227 + $0x10] sm:$0xf]
      %v245 = vld [vmem:[%s227 + $0x14] sm:$0xf]
      %v246 = vld [vmem:[%s227 + $0x18] sm:$0xf]
      %v247 = vld [vmem:[%s227 + $0x1c] sm:$0xf]
      %v248 = vunpack.c.l.bf16 %v240
      %v249 = vunpack.c.l.bf16 %v241
      %v250 = vunpack.c.l.bf16 %v242
      %v251 = vunpack.c.l.bf16 %v243
      %v252 = vunpack.c.l.bf16 %v244
      %v253 = vunpack.c.l.bf16 %v245
      %v254 = vunpack.c.l.bf16 %v246
      %v255 = vunpack.c.l.bf16 %v247
      %v256 = vld [vmem:[%s1] sm:$0x1]
      %v258 = vlaneseq
      %v259 = vshrl.u32 %v258, 7
      %v260 = vsub.s32 0, %v259
      %v261 = vrot.slane %v256, %v260
      %v263 = vmul.f32 %v248, %v261
      %v264 = vmul.f32 %v249, %v261
      %v265 = vmul.f32 %v250, %v261
      %v266 = vmul.f32 %v251, %v261
      %v267 = vmul.f32 %v252, %v261
      %v268 = vmul.f32 %v253, %v261
      %v269 = vmul.f32 %v254, %v261
      %v270 = vmul.f32 %v255, %v261
      %v271 = vld [vmem:[%s2] sm:$0x1]
      %v273 = vlaneseq
      %v274 = vshrl.u32 %v273, 7
      %v275 = vsub.s32 0, %v274
      %v276 = vrot.slane %v271, %v275
      %v278 = vadd.f32 %v263, %v276
      %v279 = vadd.f32 %v264, %v276
      %v280 = vadd.f32 %v265, %v276
      %v281 = vadd.f32 %v266, %v276
      %v282 = vadd.f32 %v267, %v276
      %v283 = vadd.f32 %v268, %v276
      %v284 = vadd.f32 %v269, %v276
      %v285 = vadd.f32 %v270, %v276
      %v286 = vmax.f32 %v278, 0.0
      %v287 = vmax.f32 %v279, 0.0
      %v288 = vmax.f32 %v280, 0.0
      %v289 = vmax.f32 %v281, 0.0
      %v290 = vmax.f32 %v282, 0.0
      %v291 = vmax.f32 %v283, 0.0
      %v292 = vmax.f32 %v284, 0.0
      %v293 = vmax.f32 %v285, 0.0
      %v294 = vlaneseq
      %v295 = vshrl.u32 %v294, 7
      %v296 = vadd.s32 %v295, 8
      %v297 = vadd.s32 %v295, 16
      %v298 = vadd.s32 %v295, 24
      %v299 = vadd.s32 %v295, 32
      %v300 = vadd.s32 %v295, 40
      %v301 = vadd.s32 %v295, 48
      %v302 = vadd.s32 %v295, 56
      %s303 = smul.u32 %s17, 64
      %v304 = vstv %s303
      %v305 = vadd.s32 %v295, %v304
      %v306 = vadd.s32 %v296, %v304
      %v307 = vadd.s32 %v297, %v304
      %v308 = vadd.s32 %v298, %v304
      %v309 = vadd.s32 %v299, %v304
      %v310 = vadd.s32 %v300, %v304
      %v311 = vadd.s32 %v301, %v304
      %v312 = vadd.s32 %v302, %v304
      %vm313 = vcmp.lt.s32.totalorder %v305, 250
      %vm314 = vcmp.lt.s32.totalorder %v306, 250
      %vm315 = vcmp.lt.s32.totalorder %v307, 250
      %vm316 = vcmp.lt.s32.totalorder %v308, 250
      %vm317 = vcmp.lt.s32.totalorder %v309, 250
      %vm318 = vcmp.lt.s32.totalorder %v310, 250
      %vm319 = vcmp.lt.s32.totalorder %v311, 250
      %vm320 = vcmp.lt.s32.totalorder %v312, 250
      %v321 = vsel %vm313, %v286, 0.0
      %v322 = vsel %vm314, %v287, 0.0
      %v323 = vsel %vm315, %v288, 0.0
      %v324 = vsel %vm316, %v289, 0.0
      %v325 = vsel %vm317, %v290, 0.0
      %v326 = vsel %vm318, %v291, 0.0
      %v327 = vsel %vm319, %v292, 0.0
      %v328 = vsel %vm320, %v293, 0.0
      %v329 = vpack.c.bf16 %v322, %v321
      %v330 = vpack.c.bf16 %v324, %v323
      %v331 = vpack.c.bf16 %v326, %v325
      %v332 = vpack.c.bf16 %v328, %v327
      %v333 = vld [vmem:[%s3] sm:$0xf]
      %v334 = vld [vmem:[%s3 + $0x4] sm:$0xf]
      %v335 = vld [vmem:[%s3 + $0x8] sm:$0x3]
      %v339 = vunpack.c.l.b16 %v333
      %v340 = vunpack.c.l.b16 %v334
      %v341 = vunpack.c.l.b16 %v335
      %v342 = vpack.c.b16 %v340, %v339
      %v343 = vpack.c.b16 %v341, %v341
      %vm345 = vcmask 162816
      %v347 = vsel %vm345, %v329, 0
      %v350 = vsel %vm345, %v330, 0
      %v353 = vsel %vm345, %v331, 0
      %v356 = vsel %vm345, %v332, 0
      %vm358 = vcmask 1041408
      %v360 = vsel %vm358, %v343, 0
      %362 = vmatprep.subr.bf16.mxu0 0
      %363 = vmatpush1.bf16.msra.mxu0 %v342
      %364 = vmatprep.subr.bf16.mxu0 0
      %365 = vmatpush1.bf16.msra.mxu0 %v360
      %366 = vmatprep.subr.bf16.mxu0 0
      %367 = vmatpush1.bf16.msra.mxu0 0
      %368 = vmatprep.subr.bf16.mxu0 0
      %369 = vmatpush1.bf16.msra.mxu0 0
      %370 = vmatprep.subr.bf16.mxu0 0
      %371 = vmatpush1.bf16.msra.mxu0 0
      %372 = vmatprep.subr.bf16.mxu0 0
      %373 = vmatpush1.bf16.msra.mxu0 0
      %374 = vmatprep.subr.bf16.mxu0 0
      %375 = vmatpush1.bf16.msra.mxu0 0
      %376 = vmatprep.subr.bf16.mxu0 0
      %377 = vmatpush1.bf16.msra.mxu0 0
      %378 = vmatprep.subr.bf16.mxu0 0
      %379 = vmatpush1.bf16.msra.mxu0 0
      %380 = vmatprep.subr.bf16.mxu0 0
      %381 = vmatpush1.bf16.msra.mxu0 0
      %382 = vmatprep.subr.bf16.mxu0 0
      %383 = vmatpush1.bf16.msra.mxu0 0
      %384 = vmatprep.subr.bf16.mxu0 0
      %385 = vmatpush1.bf16.msra.mxu0 0
      %386 = vmatprep.subr.bf16.mxu0 0
      %387 = vmatpush1.bf16.msra.mxu0 0
      %388 = vmatprep.subr.bf16.mxu0 0
      %389 = vmatpush1.bf16.msra.mxu0 0
      %390 = vmatprep.subr.bf16.mxu0 0
      %391 = vmatpush1.bf16.msra.mxu0 0
      %392 = vmatprep.subr.bf16.mxu0 0
      %393 = vmatpush1.bf16.msra.mxu0 0
      %394 = vmatprep.mubr.bf16.mxu0 0
      %395 = vmatmul.mubr.bf16.gmra.mrb[0].mxu0 %v347
      %v396 = vpop.f32.mrb[0].mxu0
      %v397 = vadd.f32 0.0, %v396
      %v398 = vpop.f32.mrb[0].mxu0
      %v399 = vpop.f32.mrb[0].mxu0
      %v400 = vadd.f32 0.0, %v399
      %v401 = vpop.f32.mrb[0].mxu0
      %402 = vmatprep.mubr.bf16.mxu0 0
      %403 = vmatmul.mubr.bf16.gmra.mrb[0].mxu0 %v350
      %v404 = vpop.f32.mrb[0].mxu0
      %v405 = vadd.f32 0.0, %v404
      %v406 = vpop.f32.mrb[0].mxu0
      %v407 = vpop.f32.mrb[0].mxu0
      %v408 = vadd.f32 0.0, %v407
      %v409 = vpop.f32.mrb[0].mxu0
      %410 = vmatprep.mubr.bf16.mxu0 0
      %411 = vmatmul.mubr.bf16.gmra.mrb[0].mxu0 %v353
      %v412 = vpop.f32.mrb[0].mxu0
      %v413 = vadd.f32 0.0, %v412
      %v414 = vpop.f32.mrb[0].mxu0
      %v415 = vpop.f32.mrb[0].mxu0
      %v416 = vadd.f32 0.0, %v415
      %v417 = vpop.f32.mrb[0].mxu0
      %418 = vmatprep.mubr.bf16.mxu0 0
      %419 = vmatmul.mubr.bf16.gmra.mrb[0].mxu0 %v356
      %v420 = vpop.f32.mrb[0].mxu0
      %v421 = vadd.f32 0.0, %v420
      %v422 = vpop.f32.mrb[0].mxu0
      %v423 = vpop.f32.mrb[0].mxu0
      %v424 = vadd.f32 0.0, %v423
      %v425 = vpop.f32.mrb[0].mxu0
      %426 = vdwg.mxu0
      %v427 = vpack.c.bf16 %v400, %v397
      %v428 = vpack.c.bf16 %v408, %v405
      %v429 = vpack.c.bf16 %v416, %v413
      %v430 = vpack.c.bf16 %v424, %v421
      %v435 = vunpack.c.l.b16 %v427
      %v436 = vunpack.c.h.b16 %v427
      %v437 = vunpack.c.l.b16 %v428
      %v438 = vunpack.c.h.b16 %v428
      %v439 = vunpack.c.l.b16 %v429
      %v440 = vunpack.c.h.b16 %v429
      %v441 = vunpack.c.l.b16 %v430
      %v442 = vunpack.c.h.b16 %v430
      %v443 = vpack.c.b16 %v435, %v435
      %v444 = vpack.c.b16 %v436, %v436
      %v445 = vpack.c.b16 %v437, %v437
      %v446 = vpack.c.b16 %v438, %v438
      %v447 = vpack.c.b16 %v439, %v439
      %v448 = vpack.c.b16 %v440, %v440
      %v449 = vpack.c.b16 %v441, %v441
      %v450 = vpack.c.b16 %v442, %v442
      %vm459 = vcmask 76800
      %460 = vst.msk [vmem:[%s233] sm:$0xf] %vm459, %v443
      %461 = vst.msk [vmem:[%s233 + $0x4] sm:$0xf] %vm459, %v444
      %462 = vst.msk [vmem:[%s233 + $0x8] sm:$0xf] %vm459, %v445
      %463 = vst.msk [vmem:[%s233 + $0xc] sm:$0xf] %vm459, %v446
      %464 = vst.msk [vmem:[%s233 + $0x10] sm:$0xf] %vm459, %v447
      %465 = vst.msk [vmem:[%s233 + $0x14] sm:$0xf] %vm459, %v448
      %466 = vst.msk [vmem:[%s233 + $0x18] sm:$0xf] %vm459, %v449
      %467 = vst.msk [vmem:[%s233 + $0x1c] sm:$0xf] %vm459, %v450
      %vm468 = vcmask 80896
      %v469 = vsel %vm468, %v397, 0.0
      %v470 = vsel %vm468, %v400, 0.0
      %v471 = vadd.f32 %v469, %v470
      %v472 = vsel %vm468, %v405, 0.0
      %v473 = vadd.f32 %v471, %v472
      %v474 = vsel %vm468, %v408, 0.0
      %v475 = vadd.f32 %v473, %v474
      %v476 = vsel %vm468, %v413, 0.0
      %v477 = vadd.f32 %v475, %v476
      %v478 = vsel %vm468, %v416, 0.0
      %v479 = vadd.f32 %v477, %v478
      %v480 = vsel %vm468, %v421, 0.0
      %v481 = vadd.f32 %v479, %v480
      %v482 = vsel %vm468, %v424, 0.0
      %v483 = vadd.f32 %v481, %v482
      %v484 = vrot.slane %v483, 4
      %v485 = vadd.f32 %v483, %v484
      %v486 = vrot.slane %v485, 2
      %v487 = vadd.f32 %v485, %v486
      %v488 = vrot.slane %v487, 1
      %v489 = vadd.f32 %v487, %v488
      %v490 = vmul.f32 %v397, %v397
      %v491 = vmul.f32 %v400, %v400
      %v492 = vmul.f32 %v405, %v405
      %v493 = vmul.f32 %v408, %v408
      %v494 = vmul.f32 %v413, %v413
      %v495 = vmul.f32 %v416, %v416
      %v496 = vmul.f32 %v421, %v421
      %v497 = vmul.f32 %v424, %v424
      %v498 = vsel %vm468, %v490, 0.0
      %v499 = vsel %vm468, %v491, 0.0
      %v500 = vadd.f32 %v498, %v499
      %v501 = vsel %vm468, %v492, 0.0
      %v502 = vadd.f32 %v500, %v501
      %v503 = vsel %vm468, %v493, 0.0
      %v504 = vadd.f32 %v502, %v503
      %v505 = vsel %vm468, %v494, 0.0
      %v506 = vadd.f32 %v504, %v505
      %v507 = vsel %vm468, %v495, 0.0
      %v508 = vadd.f32 %v506, %v507
      %v509 = vsel %vm468, %v496, 0.0
      %v510 = vadd.f32 %v508, %v509
      %v511 = vsel %vm468, %v497, 0.0
      %v512 = vadd.f32 %v510, %v511
      %v513 = vrot.slane %v512, 4
      %v514 = vadd.f32 %v512, %v513
      %v515 = vrot.slane %v514, 2
      %v516 = vadd.f32 %v514, %v515
      %v517 = vrot.slane %v516, 1
      %v518 = vadd.f32 %v516, %v517
      %vm519 = vcmask 1040384
      %v520 = vsel %vm519, %v489, %v518
      %v521 = vsel %vm358, %v520, 0.0
      %522 = vst.msk [vmem:[%s238] sm:$0xff] %vm468, %v521
      %s523 = smul.u32 8, %s17
      %p524 = scmp.lt.s32.totalorder %s523, 31
      %s525 = scalar_select %p524, %s523, 31
      %s526 = smul.addr %s525, 4
      %s527 = scalar_lea.vmem %s4, %s526
      %p528 = scmp.lt.s32.totalorder %s17, 3
      %s529 = scalar_select %p528, %s17, 3
      %s530 = smul.addr %s529, 8
      %s531 = scalar_lea.vmem %s5, %s530
      // Predicated region
      $region37: #{generator_forward.5} parent=35 // pred_check
        %p532 = pneg %p124
      $region38: #{generator_forward.5} parent=35 // pred_check_branch
        %534 = sbr.rel (%p532) target = $region40
      $region39: #{generator_forward.5} parent=35 // pred_region
        %s535 = smul.u32 8, %s17
      $region40: #{generator_forward.5} parent=35 // pred_fallthru
        _
      // Predicated region
      $region41: #{generator_forward.5} parent=35 // pred_check
        %p536 = pneg %p150
      $region42: #{generator_forward.5} parent=35 // pred_check_branch
        %538 = sbr.rel (%p536) target = $region44
      $region43: #{generator_forward.5} parent=35 // pred_region
        _
      $region44: #{generator_forward.5} parent=35 // pred_fallthru
        _
    $region36: #{generator_forward.5} parent=5 // pred_fallthru
      _
    %p539 = scmp.le.s32.totalorder 2, %s12
    // Predicated region
    $region45: #{generator_forward.5} parent=5 // pred_check
      %p540 = pneg %p539
    $region46: #{generator_forward.5} parent=5 // pred_check_branch
      %542 = sbr.rel (%p540) target = $region48
    $region47: #{generator_forward.5} parent=5 // pred_region
      %s543 = ssub.s32 %s12, 2
      // Predicated region
      $region49: #{generator_forward.5} parent=47 // pred_check
        %p544 = pneg %p130
      $region50: #{generator_forward.5} parent=47 // pred_check_branch
        %546 = sbr.rel (%p544) target = $region52
      $region51: #{generator_forward.5} parent=47 // pred_region
        %s547 = smul.u32 8, %s18
        %p548 = scmp.lt.s32.totalorder %s547, 31
        %s549 = scalar_select %p548, %s547, 31
        %s550 = smul.addr %s549, 4
        %s551 = scalar_lea.vmem %s4, %s550
      $region52: #{generator_forward.5} parent=47 // pred_fallthru
        _
      // Predicated region
      $region53: #{generator_forward.5} parent=47 // pred_check
        %p552 = pneg %p156
      $region54: #{generator_forward.5} parent=47 // pred_check_branch
        %554 = sbr.rel (%p552) target = $region56
      $region55: #{generator_forward.5} parent=47 // pred_region
        %p555 = scmp.lt.s32.totalorder %s18, 3
        %s556 = scalar_select %p555, %s18, 3
        %s557 = smul.addr %s556, 8
        %s558 = scalar_lea.vmem %s5, %s557
      $region56: #{generator_forward.5} parent=47 // pred_fallthru
        _
    $region48: #{generator_forward.5} parent=5 // pred_fallthru
      _
  $region6: #{generator_forward.5} parent=0 // loop_footer
    %s16 = sadd.s32 1, %s12
  $region7: #{generator_forward.5} parent=0 // loop_footer_branch
    %11 = sbr.rel target = $region3
  $region8: #{generator_forward.5} parent=0 // loop_exit
    _

// kernel: generator_forward.4
$region0: #{generator_forward.4}
  #allocation0 [shape = 'u32[]', space=smem, size = 0x4, offset = 0x4, fixed_abs, tag = 'smem constant byte address 0x4 - core index']
  #allocation1 [shape = 'u32[144,128]{1,0:T(1,128)}', space=vmem, size = 0x12000, scoped, tag = 'internal scratch']
  %s0 = inlined_call_operand.vmem [shape: bf16[256,21], index: 0, kind: input, shape index: {}]
  %s1 = inlined_call_operand.vmem [shape: bf16[21,20], index: 1, kind: input, shape index: {}]
  %s2 = inlined_call_operand.vmem [shape: bf16[256,20], index: 2, kind: output, shape index: {0}]
  %s3 = inlined_call_operand.vmem [shape: f32[32,20], index: 3, kind: output, shape index: {1}]
  %4 = xla_tuple %s2, %s3
  %s5 = sld [smem:[#allocation0]]
  $region49: #{generator_forward.4} parent=0
    _
  %s7 = ssub.s32 1, %s5
  %s8 = scalar_select 0, %s7, %s5
  loop: start=0, step=1, limit=6
  $region2: #{generator_forward.4} parent=0 // loop_pre_header
    _
  $region3: #{generator_forward.4} parent=0 // loop_header
    %s10 = sphi 0, %s14
    %p11 = scmp.ge.s32.totalorder %s10, 6
    %s20 = sphi 0, %s22
    %s23 = sphi 0, %s20
    %s24 = sphi 0, %s23
    %s40 = sphi 0, %s24
    %s44 = sphi 0, %s44
    %s46 = sphi 0, %s44
    %s47 = sphi 0, %s46
    %s61 = sphi 0, %s47
    %s67 = sphi 0, %s69
    %s70 = sphi 0, %s67
    %s71 = sphi 0, %s70
    %s87 = sphi 0, %s71
    %s93 = sphi 0, %s95
    %s96 = sphi 0, %s93
    %s97 = sphi 0, %s96
    %s113 = sphi 0, %s97
  $region4: #{generator_forward.4} parent=0 // loop_header_branch
    %13 = sbr.rel (%p11) target = $region8
  $region5: #{generator_forward.4} parent=0 // loop_body
    %s15 = ssub.s32 %s10, 1
    %s16 = ssub.s32 %s10, 2
    %s17 = sadd.s32 %s10, 1
    %s18 = ssub.s32 %s10, %s17
    %p19 = scmp.eq.s32.totalorder %s18, 0
    %s21 = sadd.s32 %s20, 1
    %s22 = scalar_select %p19, %s20, %s21
    %p25 = pneg %p19
    %p26 = scmp.eq.s32.totalorder %s10, 3
    %p27 = por %p25, %p26
    %p28 = scmp.ne.s32.totalorder %s20, %s23
    %p29 = scmp.eq.s32.totalorder %s10, 0
    %p30 = por %p28, %p29
    %p31 = scmp.ne.s32.totalorder %s20, %s23
    %p32 = scmp.eq.s32.totalorder %s15, 3
    %p33 = por %p31, %p32
    %p34 = scmp.ne.s32.totalorder %s23, %s24
    %p35 = scmp.eq.s32.totalorder %s15, 0
    %p36 = por %p34, %p35
    %p37 = scmp.ne.s32.totalorder %s23, %s24
    %p38 = scmp.eq.s32.totalorder %s16, 3
    %p39 = por %p37, %p38
    %p41 = scmp.ne.s32.totalorder %s24, %s40
    %p42 = scmp.eq.s32.totalorder %s16, 0
    %p43 = por %p41, %p42
    %s45 = sadd.s32 %s44, 1
    %p48 = scmp.eq.s32.totalorder %s10, 3
    %p49 = scmp.ne.s32.totalorder %s44, %s46
    %p50 = scmp.eq.s32.totalorder %s10, 0
    %p51 = por %p49, %p50
    %p52 = scmp.ne.s32.totalorder %s44, %s46
    %p53 = scmp.eq.s32.totalorder %s15, 3
    %p54 = por %p52, %p53
    %p55 = scmp.ne.s32.totalorder %s46, %s47
    %p56 = scmp.eq.s32.totalorder %s15, 0
    %p57 = por %p55, %p56
    %p58 = scmp.ne.s32.totalorder %s46, %s47
    %p59 = scmp.eq.s32.totalorder %s16, 3
    %p60 = por %p58, %p59
    %p62 = scmp.ne.s32.totalorder %s47, %s61
    %p63 = scmp.eq.s32.totalorder %s16, 0
    %p64 = por %p62, %p63
    %s65 = ssub.s32 %s10, %s17
    %p66 = scmp.eq.s32.totalorder %s65, 0
    %s68 = sadd.s32 %s67, 1
    %s69 = scalar_select %p66, %s67, %s68
    %p72 = pneg %p66
    %p73 = scmp.eq.s32.totalorder %s10, 3
    %p74 = por %p72, %p73
    %p75 = scmp.ne.s32.totalorder %s67, %s70
    %p76 = scmp.eq.s32.totalorder %s10, 0
    %p77 = por %p75, %p76
    %p78 = scmp.ne.s32.totalorder %s67, %s70
    %p79 = scmp.eq.s32.totalorder %s15, 3
    %p80 = por %p78, %p79
    %p81 = scmp.ne.s32.totalorder %s70, %s71
    %p82 = scmp.eq.s32.totalorder %s15, 0
    %p83 = por %p81, %p82
    %p84 = scmp.ne.s32.totalorder %s70, %s71
    %p85 = scmp.eq.s32.totalorder %s16, 3
    %p86 = por %p84, %p85
    %p88 = scmp.ne.s32.totalorder %s71, %s87
    %p89 = scmp.eq.s32.totalorder %s16, 0
    %p90 = por %p88, %p89
    %s91 = ssub.s32 %s10, %s17
    %p92 = scmp.eq.s32.totalorder %s91, 0
    %s94 = sadd.s32 %s93, 1
    %s95 = scalar_select %p92, %s93, %s94
    %p98 = pneg %p92
    %p99 = scmp.eq.s32.totalorder %s10, 3
    %p100 = por %p98, %p99
    %p101 = scmp.ne.s32.totalorder %s93, %s96
    %p102 = scmp.eq.s32.totalorder %s10, 0
    %p103 = por %p101, %p102
    %p104 = scmp.ne.s32.totalorder %s93, %s96
    %p105 = scmp.eq.s32.totalorder %s15, 3
    %p106 = por %p104, %p105
    %p107 = scmp.ne.s32.totalorder %s96, %s97
    %p108 = scmp.eq.s32.totalorder %s15, 0
    %p109 = por %p107, %p108
    %p110 = scmp.ne.s32.totalorder %s96, %s97
    %p111 = scmp.eq.s32.totalorder %s16, 3
    %p112 = por %p110, %p111
    %p114 = scmp.ne.s32.totalorder %s97, %s113
    %p115 = scmp.eq.s32.totalorder %s16, 0
    %p116 = por %p114, %p115
    %p117 = scmp.le.s32.totalorder 1, %s10
    %p118 = scmp.lt.s32.totalorder %s10, 5
    %p119 = pnand %p117, %p118
    %p120 = pneg %p119
    // Predicated region
    $region9: #{generator_forward.4} parent=5 // pred_check
      _
    $region10: #{generator_forward.4} parent=5 // pred_check_branch
      %122 = sbr.rel (%p119) target = $region12
    $region11: #{generator_forward.4} parent=5 // pred_region
      %s123 = ssub.s32 %s10, 1
      // Predicated region
      $region13: #{generator_forward.4} parent=11 // pred_check
        %p124 = pneg %p57
      $region14: #{generator_forward.4} parent=11 // pred_check_branch
        %126 = sbr.rel (%p124) target = $region16
      $region15: #{generator_forward.4} parent=11 // pred_region
        _
      $region16: #{generator_forward.4} parent=11 // pred_fallthru
        _
    $region12: #{generator_forward.4} parent=5 // pred_fallthru
      _
    %p127 = scmp.lt.s32.totalorder %s10, 4
    // Predicated region
    $region17: #{generator_forward.4} parent=5 // pred_check
      %p128 = pneg %p127
    $region18: #{generator_forward.4} parent=5 // pred_check_branch
      %130 = sbr.rel (%p128) target = $region20
    $region19: #{generator_forward.4} parent=5 // pred_region
      // Predicated region
      $region21: #{generator_forward.4} parent=19 // pred_check
        %p131 = pneg %p30
      $region22: #{generator_forward.4} parent=19 // pred_check_branch
        %133 = sbr.rel (%p131) target = $region24
      $region23: #{generator_forward.4} parent=19 // pred_region
        %s134 = smul.u32 8, %s10
        %p135 = scmp.lt.s32.totalorder %s134, 31
        %s136 = scalar_select %p135, %s134, 31
        %s137 = smul.addr %s136, 4
        %s138 = scalar_lea.vmem %s0, %s137
        %s139 = smul.u32 8, %s10
      $region24: #{generator_forward.4} parent=19 // pred_fallthru
        _
    $region20: #{generator_forward.4} parent=5 // pred_fallthru
      _
    %p140 = scmp.le.s32.totalorder 1, %s10
    %p141 = scmp.lt.s32.totalorder %s10, 5
    %p142 = pnand %p140, %p141
    %p143 = pneg %p142
    // Predicated region
    $region25: #{generator_forward.4} parent=5 // pred_check
      _
    $region26: #{generator_forward.4} parent=5 // pred_check_branch
      %145 = sbr.rel (%p142) target = $region28
    $region27: #{generator_forward.4} parent=5 // pred_region
      %s146 = ssub.s32 %s10, 1
      %s147 = smul.u32 8, %s15
      %p148 = scmp.lt.s32.totalorder %s147, 31
      %s149 = scalar_select %p148, %s147, 31
      %s150 = smul.addr %s149, 4
      %s151 = scalar_lea.vmem %s0, %s150
      %p152 = pneg %p36
      %p153 = pneg %p33
      %p154 = pneg %p57
      %p155 = pneg %p54
      %p156 = pneg %p83
      %p157 = pneg %p80
      %s158 = smul.u32 8, %s15
      %p159 = scmp.lt.s32.totalorder %s158, 31
      %s160 = scalar_select %p159, %s158, 31
      %s161 = smul.addr %s160, 4
      %s162 = scalar_lea.vmem %s2, %s161
      %p163 = pneg %p109
      %p164 = pneg %p106
      %p165 = scmp.lt.s32.totalorder %s15, 3
      %s166 = scalar_select %p165, %s15, 3
      %s167 = smul.addr %s166, 8
      %s168 = scalar_lea.vmem %s3, %s167
      %s169 = smul.u32 8, %s15
      %p170 = scmp.lt.s32.totalorder %s169, 31
      %s171 = scalar_select %p170, %s169, 31
      %s172 = smul.addr %s171, 4
      %s173 = scalar_lea.vmem %s0, %s172
      %s174 = smul.u32 8, %s15
      %s175 = smul.u32 8, %s15
      %p176 = scmp.lt.s32.totalorder %s175, 31
      %s177 = scalar_select %p176, %s175, 31
      %s178 = smul.addr %s177, 4
      %s179 = scalar_lea.vmem %s2, %s178
      %s180 = smul.u32 8, %s15
      %p181 = scmp.lt.s32.totalorder %s15, 3
      %s182 = scalar_select %p181, %s15, 3
      %s183 = smul.addr %s182, 8
      %s184 = scalar_lea.vmem %s3, %s183
      %v186 = vld [vmem:[%s173] sm:$0xf]
      %v187 = vld [vmem:[%s173 + $0x4] sm:$0xf]
      %v188 = vld [vmem:[%s173 + $0x8] sm:$0xf]
      %v189 = vld [vmem:[%s173 + $0xc] sm:$0xf]
      %v190 = vld [vmem:[%s173 + $0x10] sm:$0xf]
      %v191 = vld [vmem:[%s173 + $0x14] sm:$0xf]
      %v192 = vld [vmem:[%s173 + $0x18] sm:$0xf]
      %v193 = vld [vmem:[%s173 + $0x1c] sm:$0xf]
      %v194 = vld [vmem:[%s1] sm:$0xf]
      %v195 = vld [vmem:[%s1 + $0x4] sm:$0xf]
      %v196 = vld [vmem:[%s1 + $0x8] sm:$0x7]
      %v205 = vunpack.c.l.b16 %v186
      %v206 = vunpack.c.l.b16 %v187
      %v207 = vunpack.c.l.b16 %v188
      %v208 = vunpack.c.l.b16 %v189
      %v209 = vunpack.c.l.b16 %v190
      %v210 = vunpack.c.l.b16 %v191
      %v211 = vunpack.c.l.b16 %v192
      %v212 = vunpack.c.l.b16 %v193
      %v213 = vpack.c.b16 %v206, %v205
      %v214 = vpack.c.b16 %v208, %v207
      %v215 = vpack.c.b16 %v210, %v209
      %v216 = vpack.c.b16 %v212, %v211
      %v220 = vunpack.c.l.b16 %v194
      %v221 = vunpack.c.l.b16 %v195
      %v222 = vunpack.c.l.b16 %v196
      %v223 = vpack.c.b16 %v221, %v220
      %v224 = vpack.c.b16 %v222, %v222
      %vm226 = vcmask 171008
      %v228 = vsel %vm226, %v213, 0
      %v231 = vsel %vm226, %v214, 0
      %v234 = vsel %vm226, %v215, 0
      %v237 = vsel %vm226, %v216, 0
      %vm239 = vcmask 1041408
      %vm240 = vcmask 1042432
      %v241 = vsel %vm239, 4294967295, 65535
      %v242 = vsel %vm240, %v241, 0
      %v244 = vand.u32 %v224, %v242
      %246 = vmatprep.subr.bf16.mxu0 0
      %247 = vmatpush1.bf16.msra.mxu0 %v223
      %248 = vmatprep.subr.bf16.mxu0 0
      %249 = vmatpush1.bf16.msra.mxu0 %v244
      %250 = vmatprep.subr.bf16.mxu0 0
      %251 = vmatpush1.bf16.msra.mxu0 0
      %252 = vmatprep.subr.bf16.mxu0 0
      %253 = vmatpush1.bf16.msra.mxu0 0
      %254 = vmatprep.subr.bf16.mxu0 0
      %255 = vmatpush1.bf16.msra.mxu0 0
      %256 = vmatprep.subr.bf16.mxu0 0
      %257 = vmatpush1.bf16.msra.mxu0 0
      %258 = vmatprep.subr.bf16.mxu0 0
      %259 = vmatpush1.bf16.msra.mxu0 0
      %260 = vmatprep.subr.bf16.mxu0 0
      %261 = vmatpush1.bf16.msra.mxu0 0
      %262 = vmatprep.subr.bf16.mxu0 0
      %263 = vmatpush1.bf16.msra.mxu0 0
      %264 = vmatprep.subr.bf16.mxu0 0
      %265 = vmatpush1.bf16.msra.mxu0 0
      %266 = vmatprep.subr.bf16.mxu0 0
      %267 = vmatpush1.bf16.msra.mxu0 0
      %268 = vmatprep.subr.bf16.mxu0 0
      %269 = vmatpush1.bf16.msra.mxu0 0
      %270 = vmatprep.subr.bf16.mxu0 0
      %271 = vmatpush1.bf16.msra.mxu0 0
      %272 = vmatprep.subr.bf16.mxu0 0
      %273 = vmatpush1.bf16.msra.mxu0 0
      %274 = vmatprep.subr.bf16.mxu0 0
      %275 = vmatpush1.bf16.msra.mxu0 0
      %276 = vmatprep.subr.bf16.mxu0 0
      %277 = vmatpush1.bf16.msra.mxu0 0
      %278 = vmatprep.mubr.bf16.mxu0 0
      %279 = vmatmul.mubr.bf16.gmra.mrb[0].mxu0 %v228
      %v280 = vpop.f32.mrb[0].mxu0
      %v281 = vadd.f32 0.0, %v280
      %v282 = vpop.f32.mrb[0].mxu0
      %v283 = vpop.f32.mrb[0].mxu0
      %v284 = vadd.f32 0.0, %v283
      %v285 = vpop.f32.mrb[0].mxu0
      %286 = vmatprep.mubr.bf16.mxu0 0
      %287 = vmatmul.mubr.bf16.gmra.mrb[0].mxu0 %v231
      %v288 = vpop.f32.mrb[0].mxu0
      %v289 = vadd.f32 0.0, %v288
      %v290 = vpop.f32.mrb[0].mxu0
      %v291 = vpop.f32.mrb[0].mxu0
      %v292 = vadd.f32 0.0, %v291
      %v293 = vpop.f32.mrb[0].mxu0
      %294 = vmatprep.mubr.bf16.mxu0 0
      %295 = vmatmul.mubr.bf16.gmra.mrb[0].mxu0 %v234
      %v296 = vpop.f32.mrb[0].mxu0
      %v297 = vadd.f32 0.0, %v296
      %v298 = vpop.f32.mrb[0].mxu0
      %v299 = vpop.f32.mrb[0].mxu0
      %v300 = vadd.f32 0.0, %v299
      %v301 = vpop.f32.mrb[0].mxu0
      %302 = vmatprep.mubr.bf16.mxu0 0
      %303 = vmatmul.mubr.bf16.gmra.mrb[0].mxu0 %v237
      %v304 = vpop.f32.mrb[0].mxu0
      %v305 = vadd.f32 0.0, %v304
      %v306 = vpop.f32.mrb[0].mxu0
      %v307 = vpop.f32.mrb[0].mxu0
      %v308 = vadd.f32 0.0, %v307
      %v309 = vpop.f32.mrb[0].mxu0
      %310 = vdwg.mxu0
      %v311 = vpack.c.bf16 %v284, %v281
      %v312 = vpack.c.bf16 %v292, %v289
      %v313 = vpack.c.bf16 %v300, %v297
      %v314 = vpack.c.bf16 %v308, %v305
      %v319 = vunpack.c.l.b16 %v311
      %v320 = vunpack.c.h.b16 %v311
      %v321 = vunpack.c.l.b16 %v312
      %v322 = vunpack.c.h.b16 %v312
      %v323 = vunpack.c.l.b16 %v313
      %v324 = vunpack.c.h.b16 %v313
      %v325 = vunpack.c.l.b16 %v314
      %v326 = vunpack.c.h.b16 %v314
      %v327 = vpack.c.b16 %v319, %v319
      %v328 = vpack.c.b16 %v320, %v320
      %v329 = vpack.c.b16 %v321, %v321
      %v330 = vpack.c.b16 %v322, %v322
      %v331 = vpack.c.b16 %v323, %v323
      %v332 = vpack.c.b16 %v324, %v324
      %v333 = vpack.c.b16 %v325, %v325
      %v334 = vpack.c.b16 %v326, %v326
      %vm343 = vcmask 158720
      %344 = vst.msk [vmem:[%s179] sm:$0xf] %vm343, %v327
      %345 = vst.msk [vmem:[%s179 + $0x4] sm:$0xf] %vm343, %v328
      %346 = vst.msk [vmem:[%s179 + $0x8] sm:$0xf] %vm343, %v329
      %347 = vst.msk [vmem:[%s179 + $0xc] sm:$0xf] %vm343, %v330
      %348 = vst.msk [vmem:[%s179 + $0x10] sm:$0xf] %vm343, %v331
      %349 = vst.msk [vmem:[%s179 + $0x14] sm:$0xf] %vm343, %v332
      %350 = vst.msk [vmem:[%s179 + $0x18] sm:$0xf] %vm343, %v333
      %351 = vst.msk [vmem:[%s179 + $0x1c] sm:$0xf] %vm343, %v334
      %vm352 = vcmask 162816
      %v353 = vsel %vm352, %v281, 0.0
      %v354 = vsel %vm352, %v284, 0.0
      %v355 = vadd.f32 %v353, %v354
      %v356 = vsel %vm352, %v289, 0.0
      %v357 = vadd.f32 %v355, %v356
      %v358 = vsel %vm352, %v292, 0.0
      %v359 = vadd.f32 %v357, %v358
      %v360 = vsel %vm352, %v297, 0.0
      %v361 = vadd.f32 %v359, %v360
      %v362 = vsel %vm352, %v300, 0.0
      %v363 = vadd.f32 %v361, %v362
      %v364 = vsel %vm352, %v305, 0.0
      %v365 = vadd.f32 %v363, %v364
      %v366 = vsel %vm352, %v308, 0.0
      %v367 = vadd.f32 %v365, %v366
      %v368 = vrot.slane %v367, 4
      %v369 = vadd.f32 %v367, %v368
      %v370 = vrot.slane %v369, 2
      %v371 = vadd.f32 %v369, %v370
      %v372 = vrot.slane %v371, 1
      %v373 = vadd.f32 %v371, %v372
      %v374 = vmul.f32 %v281, %v281
      %v375 = vmul.f32 %v284, %v284
      %v376 = vmul.f32 %v289, %v289
      %v377 = vmul.f32 %v292, %v292
      %v378 = vmul.f32 %v297, %v297
      %v379 = vmul.f32 %v300, %v300
      %v380 = vmul.f32 %v305, %v305
      %v381 = vmul.f32 %v308, %v308
      %v382 = vsel %vm352, %v374, 0.0
      %v383 = vsel %vm352, %v375, 0.0
      %v384 = vadd.f32 %v382, %v383
      %v385 = vsel %vm352, %v376, 0.0
      %v386 = vadd.f32 %v384, %v385
      %v387 = vsel %vm352, %v377, 0.0
      %v388 = vadd.f32 %v386, %v387
      %v389 = vsel %vm352, %v378, 0.0
      %v390 = vadd.f32 %v388, %v389
      %v391 = vsel %vm352, %v379, 0.0
      %v392 = vadd.f32 %v390, %v391
      %v393 = vsel %vm352, %v380, 0.0
      %v394 = vadd.f32 %v392, %v393
      %v395 = vsel %vm352, %v381, 0.0
      %v396 = vadd.f32 %v394, %v395
      %v397 = vrot.slane %v396, 4
      %v398 = vadd.f32 %v396, %v397
      %v399 = vrot.slane %v398, 2
      %v400 = vadd.f32 %v398, %v399
      %v401 = vrot.slane %v400, 1
      %v402 = vadd.f32 %v400, %v401
      %vm403 = vcmask 1040384
      %v404 = vsel %vm403, %v373, %v402
      %v405 = vsel %vm239, %v404, 0.0
      %406 = vst.msk [vmem:[%s184] sm:$0xff] %vm352, %v405
      %s407 = smul.u32 8, %s15
      %p408 = scmp.lt.s32.totalorder %s407, 31
      %s409 = scalar_select %p408, %s407, 31
      %s410 = smul.addr %s409, 4
      %s411 = scalar_lea.vmem %s2, %s410
      %p412 = scmp.lt.s32.totalorder %s15, 3
      %s413 = scalar_select %p412, %s15, 3
      %s414 = smul.addr %s413, 8
      %s415 = scalar_lea.vmem %s3, %s414
      // Predicated region
      $region29: #{generator_forward.4} parent=27 // pred_check
        %p416 = pneg %p80
      $region30: #{generator_forward.4} parent=27 // pred_check_branch
        %418 = sbr.rel (%p416) target = $region32
      $region31: #{generator_forward.4} parent=27 // pred_region
        %s419 = smul.u32 8, %s15
      $region32: #{generator_forward.4} parent=27 // pred_fallthru
        _
      // Predicated region
      $region33: #{generator_forward.4} parent=27 // pred_check
        %p420 = pneg %p106
      $region34: #{generator_forward.4} parent=27 // pred_check_branch
        %422 = sbr.rel (%p420) target = $region36
      $region35: #{generator_forward.4} parent=27 // pred_region
        _
      $region36: #{generator_forward.4} parent=27 // pred_fallthru
        _
    $region28: #{generator_forward.4} parent=5 // pred_fallthru
      _
    %p423 = scmp.le.s32.totalorder 2, %s10
    // Predicated region
    $region37: #{generator_forward.4} parent=5 // pred_check
      %p424 = pneg %p423
    $region38: #{generator_forward.4} parent=5 // pred_check_branch
      %426 = sbr.rel (%p424) target = $region40
    $region39: #{generator_forward.4} parent=5 // pred_region
      %s427 = ssub.s32 %s10, 2
      // Predicated region
      $region41: #{generator_forward.4} parent=39 // pred_check
        %p428 = pneg %p86
      $region42: #{generator_forward.4} parent=39 // pred_check_branch
        %430 = sbr.rel (%p428) target = $region44
      $region43: #{generator_forward.4} parent=39 // pred_region
        %s431 = smul.u32 8, %s16
        %p432 = scmp.lt.s32.totalorder %s431, 31
        %s433 = scalar_select %p432, %s431, 31
        %s434 = smul.addr %s433, 4
        %s435 = scalar_lea.vmem %s2, %s434
      $region44: #{generator_forward.4} parent=39 // pred_fallthru
        _
      // Predicated region
      $region45: #{generator_forward.4} parent=39 // pred_check
        %p436 = pneg %p112
      $region46: #{generator_forward.4} parent=39 // pred_check_branch
        %438 = sbr.rel (%p436) target = $region48
      $region47: #{generator_forward.4} parent=39 // pred_region
        %p439 = scmp.lt.s32.totalorder %s16, 3
        %s440 = scalar_select %p439, %s16, 3
        %s441 = smul.addr %s440, 8
        %s442 = scalar_lea.vmem %s3, %s441
      $region48: #{generator_forward.4} parent=39 // pred_fallthru
        _
    $region40: #{generator_forward.4} parent=5 // pred_fallthru
      _
  $region6: #{generator_forward.4} parent=0 // loop_footer
    %s14 = sadd.s32 1, %s10
  $region7: #{generator_forward.4} parent=0 // loop_footer_branch
    %9 = sbr.rel target = $region3
  $region8: #{generator_forward.4} parent=0 // loop_exit
    _

// kernel: generator_forward.6
$region0: #{generator_forward.6}
  #allocation0 [shape = 'u32[]', space=smem, size = 0x4, offset = 0x4, fixed_abs, tag = 'smem constant byte address 0x4 - core index']
  #allocation1 [shape = 'u32[144,128]{1,0:T(1,128)}', space=vmem, size = 0x12000, scoped, tag = 'internal scratch']
  %s0 = inlined_call_operand.vmem [shape: bf16[256,10], index: 0, kind: input, shape index: {}]
  %s1 = inlined_call_operand.vmem [shape: f32[1,10], index: 1, kind: input, shape index: {}]
  %s2 = inlined_call_operand.vmem [shape: f32[1,10], index: 2, kind: input, shape index: {}]
  %s3 = inlined_call_operand.vmem [shape: bf16[10,5], index: 3, kind: input, shape index: {}]
  %s4 = inlined_call_operand.vmem [shape: bf16[256,5], index: 4, kind: output, shape index: {0}]
  %s5 = inlined_call_operand.vmem [shape: f32[32,5], index: 5, kind: output, shape index: {1}]
  %6 = xla_tuple %s4, %s5
  %s7 = sld [smem:[#allocation0]]
  $region57: #{generator_forward.6} parent=0
    _
  %s9 = ssub.s32 1, %s7
  %s10 = scalar_select 0, %s9, %s7
  loop: start=0, step=1, limit=6
  $region2: #{generator_forward.6} parent=0 // loop_pre_header
    _
  $region3: #{generator_forward.6} parent=0 // loop_header
    %s12 = sphi 0, %s16
    %p13 = scmp.ge.s32.totalorder %s12, 6
    %s22 = sphi 0, %s24
    %s25 = sphi 0, %s22
    %s26 = sphi 0, %s25
    %s42 = sphi 0, %s26
    %s46 = sphi 0, %s46
    %s48 = sphi 0, %s46
    %s49 = sphi 0, %s48
    %s63 = sphi 0, %s49
    %s67 = sphi 0, %s67
    %s69 = sphi 0, %s67
    %s70 = sphi 0, %s69
    %s84 = sphi 0, %s70
    %s88 = sphi 0, %s88
    %s90 = sphi 0, %s88
    %s91 = sphi 0, %s90
    %s105 = sphi 0, %s91
    %s111 = sphi 0, %s113
    %s114 = sphi 0, %s111
    %s115 = sphi 0, %s114
    %s131 = sphi 0, %s115
    %s137 = sphi 0, %s139
    %s140 = sphi 0, %s137
    %s141 = sphi 0, %s140
    %s157 = sphi 0, %s141
  $region4: #{generator_forward.6} parent=0 // loop_header_branch
    %15 = sbr.rel (%p13) target = $region8
  $region5: #{generator_forward.6} parent=0 // loop_body
    %s17 = ssub.s32 %s12, 1
    %s18 = ssub.s32 %s12, 2
    %s19 = sadd.s32 %s12, 1
    %s20 = ssub.s32 %s12, %s19
    %p21 = scmp.eq.s32.totalorder %s20, 0
    %s23 = sadd.s32 %s22, 1
    %s24 = scalar_select %p21, %s22, %s23
    %p27 = pneg %p21
    %p28 = scmp.eq.s32.totalorder %s12, 3
    %p29 = por %p27, %p28
    %p30 = scmp.ne.s32.totalorder %s22, %s25
    %p31 = scmp.eq.s32.totalorder %s12, 0
    %p32 = por %p30, %p31
    %p33 = scmp.ne.s32.totalorder %s22, %s25
    %p34 = scmp.eq.s32.totalorder %s17, 3
    %p35 = por %p33, %p34
    %p36 = scmp.ne.s32.totalorder %s25, %s26
    %p37 = scmp.eq.s32.totalorder %s17, 0
    %p38 = por %p36, %p37
    %p39 = scmp.ne.s32.totalorder %s25, %s26
    %p40 = scmp.eq.s32.totalorder %s18, 3
    %p41 = por %p39, %p40
    %p43 = scmp.ne.s32.totalorder %s26, %s42
    %p44 = scmp.eq.s32.totalorder %s18, 0
    %p45 = por %p43, %p44
    %s47 = sadd.s32 %s46, 1
    %p50 = scmp.eq.s32.totalorder %s12, 3
    %p51 = scmp.ne.s32.totalorder %s46, %s48
    %p52 = scmp.eq.s32.totalorder %s12, 0
    %p53 = por %p51, %p52
    %p54 = scmp.ne.s32.totalorder %s46, %s48
    %p55 = scmp.eq.s32.totalorder %s17, 3
    %p56 = por %p54, %p55
    %p57 = scmp.ne.s32.totalorder %s48, %s49
    %p58 = scmp.eq.s32.totalorder %s17, 0
    %p59 = por %p57, %p58
    %p60 = scmp.ne.s32.totalorder %s48, %s49
    %p61 = scmp.eq.s32.totalorder %s18, 3
    %p62 = por %p60, %p61
    %p64 = scmp.ne.s32.totalorder %s49, %s63
    %p65 = scmp.eq.s32.totalorder %s18, 0
    %p66 = por %p64, %p65
    %s68 = sadd.s32 %s67, 1
    %p71 = scmp.eq.s32.totalorder %s12, 3
    %p72 = scmp.ne.s32.totalorder %s67, %s69
    %p73 = scmp.eq.s32.totalorder %s12, 0
    %p74 = por %p72, %p73
    %p75 = scmp.ne.s32.totalorder %s67, %s69
    %p76 = scmp.eq.s32.totalorder %s17, 3
    %p77 = por %p75, %p76
    %p78 = scmp.ne.s32.totalorder %s69, %s70
    %p79 = scmp.eq.s32.totalorder %s17, 0
    %p80 = por %p78, %p79
    %p81 = scmp.ne.s32.totalorder %s69, %s70
    %p82 = scmp.eq.s32.totalorder %s18, 3
    %p83 = por %p81, %p82
    %p85 = scmp.ne.s32.totalorder %s70, %s84
    %p86 = scmp.eq.s32.totalorder %s18, 0
    %p87 = por %p85, %p86
    %s89 = sadd.s32 %s88, 1
    %p92 = scmp.eq.s32.totalorder %s12, 3
    %p93 = scmp.ne.s32.totalorder %s88, %s90
    %p94 = scmp.eq.s32.totalorder %s12, 0
    %p95 = por %p93, %p94
    %p96 = scmp.ne.s32.totalorder %s88, %s90
    %p97 = scmp.eq.s32.totalorder %s17, 3
    %p98 = por %p96, %p97
    %p99 = scmp.ne.s32.totalorder %s90, %s91
    %p100 = scmp.eq.s32.totalorder %s17, 0
    %p101 = por %p99, %p100
    %p102 = scmp.ne.s32.totalorder %s90, %s91
    %p103 = scmp.eq.s32.totalorder %s18, 3
    %p104 = por %p102, %p103
    %p106 = scmp.ne.s32.totalorder %s91, %s105
    %p107 = scmp.eq.s32.totalorder %s18, 0
    %p108 = por %p106, %p107
    %s109 = ssub.s32 %s12, %s19
    %p110 = scmp.eq.s32.totalorder %s109, 0
    %s112 = sadd.s32 %s111, 1
    %s113 = scalar_select %p110, %s111, %s112
    %p116 = pneg %p110
    %p117 = scmp.eq.s32.totalorder %s12, 3
    %p118 = por %p116, %p117
    %p119 = scmp.ne.s32.totalorder %s111, %s114
    %p120 = scmp.eq.s32.totalorder %s12, 0
    %p121 = por %p119, %p120
    %p122 = scmp.ne.s32.totalorder %s111, %s114
    %p123 = scmp.eq.s32.totalorder %s17, 3
    %p124 = por %p122, %p123
    %p125 = scmp.ne.s32.totalorder %s114, %s115
    %p126 = scmp.eq.s32.totalorder %s17, 0
    %p127 = por %p125, %p126
    %p128 = scmp.ne.s32.totalorder %s114, %s115
    %p129 = scmp.eq.s32.totalorder %s18, 3
    %p130 = por %p128, %p129
    %p132 = scmp.ne.s32.totalorder %s115, %s131
    %p133 = scmp.eq.s32.totalorder %s18, 0
    %p134 = por %p132, %p133
    %s135 = ssub.s32 %s12, %s19
    %p136 = scmp.eq.s32.totalorder %s135, 0
    %s138 = sadd.s32 %s137, 1
    %s139 = scalar_select %p136, %s137, %s138
    %p142 = pneg %p136
    %p143 = scmp.eq.s32.totalorder %s12, 3
    %p144 = por %p142, %p143
    %p145 = scmp.ne.s32.totalorder %s137, %s140
    %p146 = scmp.eq.s32.totalorder %s12, 0
    %p147 = por %p145, %p146
    %p148 = scmp.ne.s32.totalorder %s137, %s140
    %p149 = scmp.eq.s32.totalorder %s17, 3
    %p150 = por %p148, %p149
    %p151 = scmp.ne.s32.totalorder %s140, %s141
    %p152 = scmp.eq.s32.totalorder %s17, 0
    %p153 = por %p151, %p152
    %p154 = scmp.ne.s32.totalorder %s140, %s141
    %p155 = scmp.eq.s32.totalorder %s18, 3
    %p156 = por %p154, %p155
    %p158 = scmp.ne.s32.totalorder %s141, %s157
    %p159 = scmp.eq.s32.totalorder %s18, 0
    %p160 = por %p158, %p159
    %p161 = scmp.le.s32.totalorder 1, %s12
    %p162 = scmp.lt.s32.totalorder %s12, 5
    %p163 = pnand %p161, %p162
    %p164 = pneg %p163
    // Predicated region
    $region9: #{generator_forward.6} parent=5 // pred_check
      _
    $region10: #{generator_forward.6} parent=5 // pred_check_branch
      %166 = sbr.rel (%p163) target = $region12
    $region11: #{generator_forward.6} parent=5 // pred_region
      %s167 = ssub.s32 %s12, 1
      // Predicated region
      $region13: #{generator_forward.6} parent=11 // pred_check
        %p168 = pneg %p59
      $region14: #{generator_forward.6} parent=11 // pred_check_branch
        %170 = sbr.rel (%p168) target = $region16
      $region15: #{generator_forward.6} parent=11 // pred_region
        _
      $region16: #{generator_forward.6} parent=11 // pred_fallthru
        _
      // Predicated region
      $region17: #{generator_forward.6} parent=11 // pred_check
        %p171 = pneg %p80
      $region18: #{generator_forward.6} parent=11 // pred_check_branch
        %173 = sbr.rel (%p171) target = $region20
      $region19: #{generator_forward.6} parent=11 // pred_region
        _
      $region20: #{generator_forward.6} parent=11 // pred_fallthru
        _
      // Predicated region
      $region21: #{generator_forward.6} parent=11 // pred_check
        %p174 = pneg %p101
      $region22: #{generator_forward.6} parent=11 // pred_check_branch
        %176 = sbr.rel (%p174) target = $region24
      $region23: #{generator_forward.6} parent=11 // pred_region
        _
      $region24: #{generator_forward.6} parent=11 // pred_fallthru
        _
    $region12: #{generator_forward.6} parent=5 // pred_fallthru
      _
    %p177 = scmp.lt.s32.totalorder %s12, 4
    // Predicated region
    $region25: #{generator_forward.6} parent=5 // pred_check
      %p178 = pneg %p177
    $region26: #{generator_forward.6} parent=5 // pred_check_branch
      %180 = sbr.rel (%p178) target = $region28
    $region27: #{generator_forward.6} parent=5 // pred_region
      // Predicated region
      $region29: #{generator_forward.6} parent=27 // pred_check
        %p181 = pneg %p32
      $region30: #{generator_forward.6} parent=27 // pred_check_branch
        %183 = sbr.rel (%p181) target = $region32
      $region31: #{generator_forward.6} parent=27 // pred_region
        %s184 = smul.u32 8, %s12
        %p185 = scmp.lt.s32.totalorder %s184, 31
        %s186 = scalar_select %p185, %s184, 31
        %s187 = smul.addr %s186, 4
        %s188 = scalar_lea.vmem %s0, %s187
        %s189 = smul.u32 8, %s12
      $region32: #{generator_forward.6} parent=27 // pred_fallthru
        _
    $region28: #{generator_forward.6} parent=5 // pred_fallthru
      _
    %p190 = scmp.le.s32.totalorder 1, %s12
    %p191 = scmp.lt.s32.totalorder %s12, 5
    %p192 = pnand %p190, %p191
    %p193 = pneg %p192
    // Predicated region
    $region33: #{generator_forward.6} parent=5 // pred_check
      _
    $region34: #{generator_forward.6} parent=5 // pred_check_branch
      %195 = sbr.rel (%p192) target = $region36
    $region35: #{generator_forward.6} parent=5 // pred_region
      %s196 = ssub.s32 %s12, 1
      %s197 = smul.u32 8, %s17
      %p198 = scmp.lt.s32.totalorder %s197, 31
      %s199 = scalar_select %p198, %s197, 31
      %s200 = smul.addr %s199, 4
      %s201 = scalar_lea.vmem %s0, %s200
      %p202 = pneg %p38
      %p203 = pneg %p35
      %p204 = pneg %p59
      %p205 = pneg %p56
      %p206 = pneg %p80
      %p207 = pneg %p77
      %p208 = pneg %p101
      %p209 = pneg %p98
      %p210 = pneg %p127
      %p211 = pneg %p124
      %s212 = smul.u32 8, %s17
      %p213 = scmp.lt.s32.totalorder %s212, 31
      %s214 = scalar_select %p213, %s212, 31
      %s215 = smul.addr %s214, 4
      %s216 = scalar_lea.vmem %s4, %s215
      %p217 = pneg %p153
      %p218 = pneg %p150
      %p219 = scmp.lt.s32.totalorder %s17, 3
      %s220 = scalar_select %p219, %s17, 3
      %s221 = smul.addr %s220, 8
      %s222 = scalar_lea.vmem %s5, %s221
      %s223 = smul.u32 8, %s17
      %p224 = scmp.lt.s32.totalorder %s223, 31
      %s225 = scalar_select %p224, %s223, 31
      %s226 = smul.addr %s225, 4
      %s227 = scalar_lea.vmem %s0, %s226
      %s228 = smul.u32 8, %s17
      %s229 = smul.u32 8, %s17
      %p230 = scmp.lt.s32.totalorder %s229, 31
      %s231 = scalar_select %p230, %s229, 31
      %s232 = smul.addr %s231, 4
      %s233 = scalar_lea.vmem %s4, %s232
      %s234 = smul.u32 8, %s17
      %p235 = scmp.lt.s32.totalorder %s17, 3
      %s236 = scalar_select %p235, %s17, 3
      %s237 = smul.addr %s236, 8
      %s238 = scalar_lea.vmem %s5, %s237
      %v240 = vld [vmem:[%s227] sm:$0xf]
      %v241 = vld [vmem:[%s227 + $0x4] sm:$0xf]
      %v242 = vld [vmem:[%s227 + $0x8] sm:$0xf]
      %v243 = vld [vmem:[%s227 + $0xc] sm:$0xf]
      %v244 = vld [vmem:[%s227 + $0x10] sm:$0xf]
      %v245 = vld [vmem:[%s227 + $0x14] sm:$0xf]
      %v246 = vld [vmem:[%s227 + $0x18] sm:$0xf]
      %v247 = vld [vmem:[%s227 + $0x1c] sm:$0xf]
      %v248 = vunpack.c.l.bf16 %v240
      %v249 = vunpack.c.l.bf16 %v241
      %v250 = vunpack.c.l.bf16 %v242
      %v251 = vunpack.c.l.bf16 %v243
      %v252 = vunpack.c.l.bf16 %v244
      %v253 = vunpack.c.l.bf16 %v245
      %v254 = vunpack.c.l.bf16 %v246
      %v255 = vunpack.c.l.bf16 %v247
      %v256 = vld [vmem:[%s1] sm:$0x1]
      %v258 = vlaneseq
      %v259 = vshrl.u32 %v258, 7
      %v260 = vsub.s32 0, %v259
      %v261 = vrot.slane %v256, %v260
      %v263 = vmul.f32 %v248, %v261
      %v264 = vmul.f32 %v249, %v261
      %v265 = vmul.f32 %v250, %v261
      %v266 = vmul.f32 %v251, %v261
      %v267 = vmul.f32 %v252, %v261
      %v268 = vmul.f32 %v253, %v261
      %v269 = vmul.f32 %v254, %v261
      %v270 = vmul.f32 %v255, %v261
      %v271 = vld [vmem:[%s2] sm:$0x1]
      %v273 = vlaneseq
      %v274 = vshrl.u32 %v273, 7
      %v275 = vsub.s32 0, %v274
      %v276 = vrot.slane %v271, %v275
      %v278 = vadd.f32 %v263, %v276
      %v279 = vadd.f32 %v264, %v276
      %v280 = vadd.f32 %v265, %v276
      %v281 = vadd.f32 %v266, %v276
      %v282 = vadd.f32 %v267, %v276
      %v283 = vadd.f32 %v268, %v276
      %v284 = vadd.f32 %v269, %v276
      %v285 = vadd.f32 %v270, %v276
      %v286 = vmax.f32 %v278, 0.0
      %v287 = vmax.f32 %v279, 0.0
      %v288 = vmax.f32 %v280, 0.0
      %v289 = vmax.f32 %v281, 0.0
      %v290 = vmax.f32 %v282, 0.0
      %v291 = vmax.f32 %v283, 0.0
      %v292 = vmax.f32 %v284, 0.0
      %v293 = vmax.f32 %v285, 0.0
      %v294 = vlaneseq
      %v295 = vshrl.u32 %v294, 7
      %v296 = vadd.s32 %v295, 8
      %v297 = vadd.s32 %v295, 16
      %v298 = vadd.s32 %v295, 24
      %v299 = vadd.s32 %v295, 32
      %v300 = vadd.s32 %v295, 40
      %v301 = vadd.s32 %v295, 48
      %v302 = vadd.s32 %v295, 56
      %s303 = smul.u32 %s17, 64
      %v304 = vstv %s303
      %v305 = vadd.s32 %v295, %v304
      %v306 = vadd.s32 %v296, %v304
      %v307 = vadd.s32 %v297, %v304
      %v308 = vadd.s32 %v298, %v304
      %v309 = vadd.s32 %v299, %v304
      %v310 = vadd.s32 %v300, %v304
      %v311 = vadd.s32 %v301, %v304
      %v312 = vadd.s32 %v302, %v304
      %vm313 = vcmp.lt.s32.totalorder %v305, 250
      %vm314 = vcmp.lt.s32.totalorder %v306, 250
      %vm315 = vcmp.lt.s32.totalorder %v307, 250
      %vm316 = vcmp.lt.s32.totalorder %v308, 250
      %vm317 = vcmp.lt.s32.totalorder %v309, 250
      %vm318 = vcmp.lt.s32.totalorder %v310, 250
      %vm319 = vcmp.lt.s32.totalorder %v311, 250
      %vm320 = vcmp.lt.s32.totalorder %v312, 250
      %v321 = vsel %vm313, %v286, 0.0
      %v322 = vsel %vm314, %v287, 0.0
      %v323 = vsel %vm315, %v288, 0.0
      %v324 = vsel %vm316, %v289, 0.0
      %v325 = vsel %vm317, %v290, 0.0
      %v326 = vsel %vm318, %v291, 0.0
      %v327 = vsel %vm319, %v292, 0.0
      %v328 = vsel %vm320, %v293, 0.0
      %v329 = vpack.c.bf16 %v322, %v321
      %v330 = vpack.c.bf16 %v324, %v323
      %v331 = vpack.c.bf16 %v326, %v325
      %v332 = vpack.c.bf16 %v328, %v327
      %v333 = vld [vmem:[%s3] sm:$0xf]
      %v334 = vld [vmem:[%s3 + $0x4] sm:$0x1]
      %v337 = vunpack.c.l.b16 %v333
      %v338 = vunpack.c.l.b16 %v334
      %v339 = vpack.c.b16 %v338, %v337
      %vm340 = vcmask 80896
      %v342 = vsel %vm340, %v329, 0
      %v345 = vsel %vm340, %v330, 0
      %v348 = vsel %vm340, %v331, 0
      %v351 = vsel %vm340, %v332, 0
      %vm353 = vcmask 1044480
      %v355 = vsel %vm353, %v339, 0
      %357 = vmatprep.subr.bf16.mxu0 0
      %358 = vmatpush1.bf16.msra.mxu0 %v355
      %359 = vmatprep.subr.bf16.mxu0 0
      %360 = vmatpush1.bf16.msra.mxu0 0
      %361 = vmatprep.subr.bf16.mxu0 0
      %362 = vmatpush1.bf16.msra.mxu0 0
      %363 = vmatprep.subr.bf16.mxu0 0
      %364 = vmatpush1.bf16.msra.mxu0 0
      %365 = vmatprep.subr.bf16.mxu0 0
      %366 = vmatpush1.bf16.msra.mxu0 0
      %367 = vmatprep.subr.bf16.mxu0 0
      %368 = vmatpush1.bf16.msra.mxu0 0
      %369 = vmatprep.subr.bf16.mxu0 0
      %370 = vmatpush1.bf16.msra.mxu0 0
      %371 = vmatprep.subr.bf16.mxu0 0
      %372 = vmatpush1.bf16.msra.mxu0 0
      %373 = vmatprep.subr.bf16.mxu0 0
      %374 = vmatpush1.bf16.msra.mxu0 0
      %375 = vmatprep.subr.bf16.mxu0 0
      %376 = vmatpush1.bf16.msra.mxu0 0
      %377 = vmatprep.subr.bf16.mxu0 0
      %378 = vmatpush1.bf16.msra.mxu0 0
      %379 = vmatprep.subr.bf16.mxu0 0
      %380 = vmatpush1.bf16.msra.mxu0 0
      %381 = vmatprep.subr.bf16.mxu0 0
      %382 = vmatpush1.bf16.msra.mxu0 0
      %383 = vmatprep.subr.bf16.mxu0 0
      %384 = vmatpush1.bf16.msra.mxu0 0
      %385 = vmatprep.subr.bf16.mxu0 0
      %386 = vmatpush1.bf16.msra.mxu0 0
      %387 = vmatprep.subr.bf16.mxu0 0
      %388 = vmatpush1.bf16.msra.mxu0 0
      %389 = vmatprep.mubr.bf16.mxu0 0
      %390 = vmatmul.mubr.bf16.gmra.mrb[0].mxu0 %v342
      %v391 = vpop.f32.mrb[0].mxu0
      %v392 = vadd.f32 0.0, %v391
      %v393 = vpop.f32.mrb[0].mxu0
      %v394 = vpop.f32.mrb[0].mxu0
      %v395 = vadd.f32 0.0, %v394
      %v396 = vpop.f32.mrb[0].mxu0
      %397 = vmatprep.mubr.bf16.mxu0 0
      %398 = vmatmul.mubr.bf16.gmra.mrb[0].mxu0 %v345
      %v399 = vpop.f32.mrb[0].mxu0
      %v400 = vadd.f32 0.0, %v399
      %v401 = vpop.f32.mrb[0].mxu0
      %v402 = vpop.f32.mrb[0].mxu0
      %v403 = vadd.f32 0.0, %v402
      %v404 = vpop.f32.mrb[0].mxu0
      %405 = vmatprep.mubr.bf16.mxu0 0
      %406 = vmatmul.mubr.bf16.gmra.mrb[0].mxu0 %v348
      %v407 = vpop.f32.mrb[0].mxu0
      %v408 = vadd.f32 0.0, %v407
      %v409 = vpop.f32.mrb[0].mxu0
      %v410 = vpop.f32.mrb[0].mxu0
      %v411 = vadd.f32 0.0, %v410
      %v412 = vpop.f32.mrb[0].mxu0
      %413 = vmatprep.mubr.bf16.mxu0 0
      %414 = vmatmul.mubr.bf16.gmra.mrb[0].mxu0 %v351
      %v415 = vpop.f32.mrb[0].mxu0
      %v416 = vadd.f32 0.0, %v415
      %v417 = vpop.f32.mrb[0].mxu0
      %v418 = vpop.f32.mrb[0].mxu0
      %v419 = vadd.f32 0.0, %v418
      %v420 = vpop.f32.mrb[0].mxu0
      %421 = vdwg.mxu0
      %v422 = vpack.c.bf16 %v395, %v392
      %v423 = vpack.c.bf16 %v403, %v400
      %v424 = vpack.c.bf16 %v411, %v408
      %v425 = vpack.c.bf16 %v419, %v416
      %v430 = vunpack.c.l.b16 %v422
      %v431 = vunpack.c.h.b16 %v422
      %v432 = vunpack.c.l.b16 %v423
      %v433 = vunpack.c.h.b16 %v423
      %v434 = vunpack.c.l.b16 %v424
      %v435 = vunpack.c.h.b16 %v424
      %v436 = vunpack.c.l.b16 %v425
      %v437 = vunpack.c.h.b16 %v425
      %v438 = vpack.c.b16 %v430, %v430
      %v439 = vpack.c.b16 %v431, %v431
      %v440 = vpack.c.b16 %v432, %v432
      %v441 = vpack.c.b16 %v433, %v433
      %v442 = vpack.c.b16 %v434, %v434
      %v443 = vpack.c.b16 %v435, %v435
      %v444 = vpack.c.b16 %v436, %v436
      %v445 = vpack.c.b16 %v437, %v437
      %vm454 = vcmask 35840
      %455 = vst.msk [vmem:[%s233] sm:$0xf] %vm454, %v438
      %456 = vst.msk [vmem:[%s233 + $0x4] sm:$0xf] %vm454, %v439
      %457 = vst.msk [vmem:[%s233 + $0x8] sm:$0xf] %vm454, %v440
      %458 = vst.msk [vmem:[%s233 + $0xc] sm:$0xf] %vm454, %v441
      %459 = vst.msk [vmem:[%s233 + $0x10] sm:$0xf] %vm454, %v442
      %460 = vst.msk [vmem:[%s233 + $0x14] sm:$0xf] %vm454, %v443
      %461 = vst.msk [vmem:[%s233 + $0x18] sm:$0xf] %vm454, %v444
      %462 = vst.msk [vmem:[%s233 + $0x1c] sm:$0xf] %vm454, %v445
      %vm463 = vcmask 39936
      %v464 = vsel %vm463, %v392, 0.0
      %v465 = vsel %vm463, %v395, 0.0
      %v466 = vadd.f32 %v464, %v465
      %v467 = vsel %vm463, %v400, 0.0
      %v468 = vadd.f32 %v466, %v467
      %v469 = vsel %vm463, %v403, 0.0
      %v470 = vadd.f32 %v468, %v469
      %v471 = vsel %vm463, %v408, 0.0
      %v472 = vadd.f32 %v470, %v471
      %v473 = vsel %vm463, %v411, 0.0
      %v474 = vadd.f32 %v472, %v473
      %v475 = vsel %vm463, %v416, 0.0
      %v476 = vadd.f32 %v474, %v475
      %v477 = vsel %vm463, %v419, 0.0
      %v478 = vadd.f32 %v476, %v477
      %v479 = vrot.slane %v478, 4
      %v480 = vadd.f32 %v478, %v479
      %v481 = vrot.slane %v480, 2
      %v482 = vadd.f32 %v480, %v481
      %v483 = vrot.slane %v482, 1
      %v484 = vadd.f32 %v482, %v483
      %v485 = vmul.f32 %v392, %v392
      %v486 = vmul.f32 %v395, %v395
      %v487 = vmul.f32 %v400, %v400
      %v488 = vmul.f32 %v403, %v403
      %v489 = vmul.f32 %v408, %v408
      %v490 = vmul.f32 %v411, %v411
      %v491 = vmul.f32 %v416, %v416
      %v492 = vmul.f32 %v419, %v419
      %v493 = vsel %vm463, %v485, 0.0
      %v494 = vsel %vm463, %v486, 0.0
      %v495 = vadd.f32 %v493, %v494
      %v496 = vsel %vm463, %v487, 0.0
      %v497 = vadd.f32 %v495, %v496
      %v498 = vsel %vm463, %v488, 0.0
      %v499 = vadd.f32 %v497, %v498
      %v500 = vsel %vm463, %v489, 0.0
      %v501 = vadd.f32 %v499, %v500
      %v502 = vsel %vm463, %v490, 0.0
      %v503 = vadd.f32 %v501, %v502
      %v504 = vsel %vm463, %v491, 0.0
      %v505 = vadd.f32 %v503, %v504
      %v506 = vsel %vm463, %v492, 0.0
      %v507 = vadd.f32 %v505, %v506
      %v508 = vrot.slane %v507, 4
      %v509 = vadd.f32 %v507, %v508
      %v510 = vrot.slane %v509, 2
      %v511 = vadd.f32 %v509, %v510
      %v512 = vrot.slane %v511, 1
      %v513 = vadd.f32 %v511, %v512
      %vm514 = vcmask 1040384
      %v515 = vsel %vm514, %v484, %v513
      %vm516 = vcmask 1041408
      %v517 = vsel %vm516, %v515, 0.0
      %518 = vst.msk [vmem:[%s238] sm:$0xff] %vm463, %v517
      %s519 = smul.u32 8, %s17
      %p520 = scmp.lt.s32.totalorder %s519, 31
      %s521 = scalar_select %p520, %s519, 31
      %s522 = smul.addr %s521, 4
      %s523 = scalar_lea.vmem %s4, %s522
      %p524 = scmp.lt.s32.totalorder %s17, 3
      %s525 = scalar_select %p524, %s17, 3
      %s526 = smul.addr %s525, 8
      %s527 = scalar_lea.vmem %s5, %s526
      // Predicated region
      $region37: #{generator_forward.6} parent=35 // pred_check
        %p528 = pneg %p124
      $region38: #{generator_forward.6} parent=35 // pred_check_branch
        %530 = sbr.rel (%p528) target = $region40
      $region39: #{generator_forward.6} parent=35 // pred_region
        %s531 = smul.u32 8, %s17
      $region40: #{generator_forward.6} parent=35 // pred_fallthru
        _
      // Predicated region
      $region41: #{generator_forward.6} parent=35 // pred_check
        %p532 = pneg %p150
      $region42: #{generator_forward.6} parent=35 // pred_check_branch
        %534 = sbr.rel (%p532) target = $region44
      $region43: #{generator_forward.6} parent=35 // pred_region
        _
      $region44: #{generator_forward.6} parent=35 // pred_fallthru
        _
    $region36: #{generator_forward.6} parent=5 // pred_fallthru
      _
    %p535 = scmp.le.s32.totalorder 2, %s12
    // Predicated region
    $region45: #{generator_forward.6} parent=5 // pred_check
      %p536 = pneg %p535
    $region46: #{generator_forward.6} parent=5 // pred_check_branch
      %538 = sbr.rel (%p536) target = $region48
    $region47: #{generator_forward.6} parent=5 // pred_region
      %s539 = ssub.s32 %s12, 2
      // Predicated region
      $region49: #{generator_forward.6} parent=47 // pred_check
        %p540 = pneg %p130
      $region50: #{generator_forward.6} parent=47 // pred_check_branch
        %542 = sbr.rel (%p540) target = $region52
      $region51: #{generator_forward.6} parent=47 // pred_region
        %s543 = smul.u32 8, %s18
        %p544 = scmp.lt.s32.totalorder %s543, 31
        %s545 = scalar_select %p544, %s543, 31
        %s546 = smul.addr %s545, 4
        %s547 = scalar_lea.vmem %s4, %s546
      $region52: #{generator_forward.6} parent=47 // pred_fallthru
        _
      // Predicated region
      $region53: #{generator_forward.6} parent=47 // pred_check
        %p548 = pneg %p156
      $region54: #{generator_forward.6} parent=47 // pred_check_branch
        %550 = sbr.rel (%p548) target = $region56
      $region55: #{generator_forward.6} parent=47 // pred_region
        %p551 = scmp.lt.s32.totalorder %s18, 3
        %s552 = scalar_select %p551, %s18, 3
        %s553 = smul.addr %s552, 8
        %s554 = scalar_lea.vmem %s5, %s553
      $region56: #{generator_forward.6} parent=47 // pred_fallthru
        _
    $region48: #{generator_forward.6} parent=5 // pred_fallthru
      _
  $region6: #{generator_forward.6} parent=0 // loop_footer
    %s16 = sadd.s32 1, %s12
  $region7: #{generator_forward.6} parent=0 // loop_footer_branch
    %11 = sbr.rel target = $region3
  $region8: #{generator_forward.6} parent=0 // loop_exit
    _

// kernel: generator_forward.7
$region0: #{generator_forward.7}
  #allocation0 [shape = 'u32[]', space=smem, size = 0x4, offset = 0x4, fixed_abs, tag = 'smem constant byte address 0x4 - core index']
  #allocation1 [shape = 'u32[144,128]{1,0:T(1,128)}', space=vmem, size = 0x12000, scoped, tag = 'internal scratch']
  #allocation2 [shape = 'f32[1,1]{1,0:T(1,128)S(1)}', space=vmem, size = 0x200, scoped, tag = 'scoped memory for generator_forward.7']
  %s0 = inlined_call_operand.vmem [shape: bf16[256,5], index: 0, kind: input, shape index: {}]
  %s1 = inlined_call_operand.vmem [shape: f32[1,5], index: 1, kind: input, shape index: {}]
  %s2 = inlined_call_operand.vmem [shape: f32[1,5], index: 2, kind: input, shape index: {}]
  %s3 = inlined_call_operand.vmem [shape: f32[1,5], index: 3, kind: input, shape index: {}]
  %s4 = inlined_call_operand.<no memory space> [shape: f32[1,1], index: 4, kind: input, shape index: {}]
  %s5 = inlined_call_operand.vmem [shape: f32[256,1], index: 5, kind: output, shape index: {}]
  %s6 = sld [smem:[#allocation0]]
  $region53: #{generator_forward.7} parent=0
    _
  %s8 = ssub.s32 1, %s6
  %s9 = scalar_select 0, %s8, %s6
  %v10 = vstv %s4
  %11 = vst [vmem:[#allocation2] sm:$0x1] %v10
  loop: start=0, step=1, limit=6
  $region2: #{generator_forward.7} parent=0 // loop_pre_header
    _
  $region3: #{generator_forward.7} parent=0 // loop_header
    %s13 = sphi 0, %s17
    %p14 = scmp.ge.s32.totalorder %s13, 6
    %s23 = sphi 0, %s25
    %s26 = sphi 0, %s23
    %s27 = sphi 0, %s26
    %s43 = sphi 0, %s27
    %s47 = sphi 0, %s47
    %s49 = sphi 0, %s47
    %s50 = sphi 0, %s49
    %s64 = sphi 0, %s50
    %s68 = sphi 0, %s68
    %s70 = sphi 0, %s68
    %s71 = sphi 0, %s70
    %s85 = sphi 0, %s71
    %s89 = sphi 0, %s89
    %s91 = sphi 0, %s89
    %s92 = sphi 0, %s91
    %s106 = sphi 0, %s92
    %s110 = sphi 0, %s110
    %s112 = sphi 0, %s110
    %s113 = sphi 0, %s112
    %s127 = sphi 0, %s113
    %s133 = sphi 0, %s135
    %s136 = sphi 0, %s133
    %s137 = sphi 0, %s136
    %s153 = sphi 0, %s137
  $region4: #{generator_forward.7} parent=0 // loop_header_branch
    %16 = sbr.rel (%p14) target = $region8
  $region5: #{generator_forward.7} parent=0 // loop_body
    %s18 = ssub.s32 %s13, 1
    %s19 = ssub.s32 %s13, 2
    %s20 = sadd.s32 %s13, 1
    %s21 = ssub.s32 %s13, %s20
    %p22 = scmp.eq.s32.totalorder %s21, 0
    %s24 = sadd.s32 %s23, 1
    %s25 = scalar_select %p22, %s23, %s24
    %p28 = pneg %p22
    %p29 = scmp.eq.s32.totalorder %s13, 3
    %p30 = por %p28, %p29
    %p31 = scmp.ne.s32.totalorder %s23, %s26
    %p32 = scmp.eq.s32.totalorder %s13, 0
    %p33 = por %p31, %p32
    %p34 = scmp.ne.s32.totalorder %s23, %s26
    %p35 = scmp.eq.s32.totalorder %s18, 3
    %p36 = por %p34, %p35
    %p37 = scmp.ne.s32.totalorder %s26, %s27
    %p38 = scmp.eq.s32.totalorder %s18, 0
    %p39 = por %p37, %p38
    %p40 = scmp.ne.s32.totalorder %s26, %s27
    %p41 = scmp.eq.s32.totalorder %s19, 3
    %p42 = por %p40, %p41
    %p44 = scmp.ne.s32.totalorder %s27, %s43
    %p45 = scmp.eq.s32.totalorder %s19, 0
    %p46 = por %p44, %p45
    %s48 = sadd.s32 %s47, 1
    %p51 = scmp.eq.s32.totalorder %s13, 3
    %p52 = scmp.ne.s32.totalorder %s47, %s49
    %p53 = scmp.eq.s32.totalorder %s13, 0
    %p54 = por %p52, %p53
    %p55 = scmp.ne.s32.totalorder %s47, %s49
    %p56 = scmp.eq.s32.totalorder %s18, 3
    %p57 = por %p55, %p56
    %p58 = scmp.ne.s32.totalorder %s49, %s50
    %p59 = scmp.eq.s32.totalorder %s18, 0
    %p60 = por %p58, %p59
    %p61 = scmp.ne.s32.totalorder %s49, %s50
    %p62 = scmp.eq.s32.totalorder %s19, 3
    %p63 = por %p61, %p62
    %p65 = scmp.ne.s32.totalorder %s50, %s64
    %p66 = scmp.eq.s32.totalorder %s19, 0
    %p67 = por %p65, %p66
    %s69 = sadd.s32 %s68, 1
    %p72 = scmp.eq.s32.totalorder %s13, 3
    %p73 = scmp.ne.s32.totalorder %s68, %s70
    %p74 = scmp.eq.s32.totalorder %s13, 0
    %p75 = por %p73, %p74
    %p76 = scmp.ne.s32.totalorder %s68, %s70
    %p77 = scmp.eq.s32.totalorder %s18, 3
    %p78 = por %p76, %p77
    %p79 = scmp.ne.s32.totalorder %s70, %s71
    %p80 = scmp.eq.s32.totalorder %s18, 0
    %p81 = por %p79, %p80
    %p82 = scmp.ne.s32.totalorder %s70, %s71
    %p83 = scmp.eq.s32.totalorder %s19, 3
    %p84 = por %p82, %p83
    %p86 = scmp.ne.s32.totalorder %s71, %s85
    %p87 = scmp.eq.s32.totalorder %s19, 0
    %p88 = por %p86, %p87
    %s90 = sadd.s32 %s89, 1
    %p93 = scmp.eq.s32.totalorder %s13, 3
    %p94 = scmp.ne.s32.totalorder %s89, %s91
    %p95 = scmp.eq.s32.totalorder %s13, 0
    %p96 = por %p94, %p95
    %p97 = scmp.ne.s32.totalorder %s89, %s91
    %p98 = scmp.eq.s32.totalorder %s18, 3
    %p99 = por %p97, %p98
    %p100 = scmp.ne.s32.totalorder %s91, %s92
    %p101 = scmp.eq.s32.totalorder %s18, 0
    %p102 = por %p100, %p101
    %p103 = scmp.ne.s32.totalorder %s91, %s92
    %p104 = scmp.eq.s32.totalorder %s19, 3
    %p105 = por %p103, %p104
    %p107 = scmp.ne.s32.totalorder %s92, %s106
    %p108 = scmp.eq.s32.totalorder %s19, 0
    %p109 = por %p107, %p108
    %s111 = sadd.s32 %s110, 1
    %p114 = scmp.eq.s32.totalorder %s13, 3
    %p115 = scmp.ne.s32.totalorder %s110, %s112
    %p116 = scmp.eq.s32.totalorder %s13, 0
    %p117 = por %p115, %p116
    %p118 = scmp.ne.s32.totalorder %s110, %s112
    %p119 = scmp.eq.s32.totalorder %s18, 3
    %p120 = por %p118, %p119
    %p121 = scmp.ne.s32.totalorder %s112, %s113
    %p122 = scmp.eq.s32.totalorder %s18, 0
    %p123 = por %p121, %p122
    %p124 = scmp.ne.s32.totalorder %s112, %s113
    %p125 = scmp.eq.s32.totalorder %s19, 3
    %p126 = por %p124, %p125
    %p128 = scmp.ne.s32.totalorder %s113, %s127
    %p129 = scmp.eq.s32.totalorder %s19, 0
    %p130 = por %p128, %p129
    %s131 = ssub.s32 %s13, %s20
    %p132 = scmp.eq.s32.totalorder %s131, 0
    %s134 = sadd.s32 %s133, 1
    %s135 = scalar_select %p132, %s133, %s134
    %p138 = pneg %p132
    %p139 = scmp.eq.s32.totalorder %s13, 3
    %p140 = por %p138, %p139
    %p141 = scmp.ne.s32.totalorder %s133, %s136
    %p142 = scmp.eq.s32.totalorder %s13, 0
    %p143 = por %p141, %p142
    %p144 = scmp.ne.s32.totalorder %s133, %s136
    %p145 = scmp.eq.s32.totalorder %s18, 3
    %p146 = por %p144, %p145
    %p147 = scmp.ne.s32.totalorder %s136, %s137
    %p148 = scmp.eq.s32.totalorder %s18, 0
    %p149 = por %p147, %p148
    %p150 = scmp.ne.s32.totalorder %s136, %s137
    %p151 = scmp.eq.s32.totalorder %s19, 3
    %p152 = por %p150, %p151
    %p154 = scmp.ne.s32.totalorder %s137, %s153
    %p155 = scmp.eq.s32.totalorder %s19, 0
    %p156 = por %p154, %p155
    %p157 = scmp.le.s32.totalorder 1, %s13
    %p158 = scmp.lt.s32.totalorder %s13, 5
    %p159 = pnand %p157, %p158
    %p160 = pneg %p159
    // Predicated region
    $region9: #{generator_forward.7} parent=5 // pred_check
      _
    $region10: #{generator_forward.7} parent=5 // pred_check_branch
      %162 = sbr.rel (%p159) target = $region12
    $region11: #{generator_forward.7} parent=5 // pred_region
      %s163 = ssub.s32 %s13, 1
      // Predicated region
      $region13: #{generator_forward.7} parent=11 // pred_check
        %p164 = pneg %p60
      $region14: #{generator_forward.7} parent=11 // pred_check_branch
        %166 = sbr.rel (%p164) target = $region16
      $region15: #{generator_forward.7} parent=11 // pred_region
        _
      $region16: #{generator_forward.7} parent=11 // pred_fallthru
        _
      // Predicated region
      $region17: #{generator_forward.7} parent=11 // pred_check
        %p167 = pneg %p81
      $region18: #{generator_forward.7} parent=11 // pred_check_branch
        %169 = sbr.rel (%p167) target = $region20
      $region19: #{generator_forward.7} parent=11 // pred_region
        _
      $region20: #{generator_forward.7} parent=11 // pred_fallthru
        _
      // Predicated region
      $region21: #{generator_forward.7} parent=11 // pred_check
        %p170 = pneg %p102
      $region22: #{generator_forward.7} parent=11 // pred_check_branch
        %172 = sbr.rel (%p170) target = $region24
      $region23: #{generator_forward.7} parent=11 // pred_region
        _
      $region24: #{generator_forward.7} parent=11 // pred_fallthru
        _
      // Predicated region
      $region25: #{generator_forward.7} parent=11 // pred_check
        %p173 = pneg %p123
      $region26: #{generator_forward.7} parent=11 // pred_check_branch
        %175 = sbr.rel (%p173) target = $region28
      $region27: #{generator_forward.7} parent=11 // pred_region
        _
      $region28: #{generator_forward.7} parent=11 // pred_fallthru
        _
    $region12: #{generator_forward.7} parent=5 // pred_fallthru
      _
    %p176 = scmp.lt.s32.totalorder %s13, 4
    // Predicated region
    $region29: #{generator_forward.7} parent=5 // pred_check
      %p177 = pneg %p176
    $region30: #{generator_forward.7} parent=5 // pred_check_branch
      %179 = sbr.rel (%p177) target = $region32
    $region31: #{generator_forward.7} parent=5 // pred_region
      // Predicated region
      $region33: #{generator_forward.7} parent=31 // pred_check
        %p180 = pneg %p33
      $region34: #{generator_forward.7} parent=31 // pred_check_branch
        %182 = sbr.rel (%p180) target = $region36
      $region35: #{generator_forward.7} parent=31 // pred_region
        %s183 = smul.u32 8, %s13
        %p184 = scmp.lt.s32.totalorder %s183, 31
        %s185 = scalar_select %p184, %s183, 31
        %s186 = smul.addr %s185, 4
        %s187 = scalar_lea.vmem %s0, %s186
        %s188 = smul.u32 8, %s13
      $region36: #{generator_forward.7} parent=31 // pred_fallthru
        _
    $region32: #{generator_forward.7} parent=5 // pred_fallthru
      _
    %p189 = scmp.le.s32.totalorder 1, %s13
    %p190 = scmp.lt.s32.totalorder %s13, 5
    %p191 = pnand %p189, %p190
    %p192 = pneg %p191
    // Predicated region
    $region37: #{generator_forward.7} parent=5 // pred_check
      _
    $region38: #{generator_forward.7} parent=5 // pred_check_branch
      %194 = sbr.rel (%p191) target = $region40
    $region39: #{generator_forward.7} parent=5 // pred_region
      %s195 = ssub.s32 %s13, 1
      %s196 = smul.u32 8, %s18
      %p197 = scmp.lt.s32.totalorder %s196, 31
      %s198 = scalar_select %p197, %s196, 31
      %s199 = smul.addr %s198, 4
      %s200 = scalar_lea.vmem %s0, %s199
      %p201 = pneg %p39
      %p202 = pneg %p36
      %p203 = pneg %p60
      %p204 = pneg %p57
      %p205 = pneg %p81
      %p206 = pneg %p78
      %p207 = pneg %p102
      %p208 = pneg %p99
      %p209 = pneg %p123
      %p210 = pneg %p120
      %p211 = pneg %p149
      %p212 = pneg %p146
      %s213 = smul.u32 8, %s18
      %p214 = scmp.lt.s32.totalorder %s213, 31
      %s215 = scalar_select %p214, %s213, 31
      %s216 = smul.addr %s215, 8
      %s217 = scalar_lea.vmem %s5, %s216
      %s218 = smul.u32 8, %s18
      %p219 = scmp.lt.s32.totalorder %s218, 31
      %s220 = scalar_select %p219, %s218, 31
      %s221 = smul.addr %s220, 4
      %s222 = scalar_lea.vmem %s0, %s221
      %s223 = smul.u32 8, %s18
      %s224 = smul.u32 8, %s18
      %p225 = scmp.lt.s32.totalorder %s224, 31
      %s226 = scalar_select %p225, %s224, 31
      %s227 = smul.addr %s226, 8
      %s228 = scalar_lea.vmem %s5, %s227
      %s229 = smul.u32 8, %s18
      %v230 = vld [vmem:[%s222] sm:$0xf]
      %v231 = vld [vmem:[%s222 + $0x4] sm:$0xf]
      %v232 = vld [vmem:[%s222 + $0x8] sm:$0xf]
      %v233 = vld [vmem:[%s222 + $0xc] sm:$0xf]
      %v234 = vld [vmem:[%s222 + $0x10] sm:$0xf]
      %v235 = vld [vmem:[%s222 + $0x14] sm:$0xf]
      %v236 = vld [vmem:[%s222 + $0x18] sm:$0xf]
      %v237 = vld [vmem:[%s222 + $0x1c] sm:$0xf]
      %v238 = vunpack.c.l.bf16 %v230
      %v239 = vunpack.c.l.bf16 %v231
      %v240 = vunpack.c.l.bf16 %v232
      %v241 = vunpack.c.l.bf16 %v233
      %v242 = vunpack.c.l.bf16 %v234
      %v243 = vunpack.c.l.bf16 %v235
      %v244 = vunpack.c.l.bf16 %v236
      %v245 = vunpack.c.l.bf16 %v237
      %v246 = vld [vmem:[%s1] sm:$0x1]
      %v248 = vlaneseq
      %v249 = vshrl.u32 %v248, 7
      %v250 = vsub.s32 0, %v249
      %v251 = vrot.slane %v246, %v250
      %v253 = vmul.f32 %v238, %v251
      %v254 = vmul.f32 %v239, %v251
      %v255 = vmul.f32 %v240, %v251
      %v256 = vmul.f32 %v241, %v251
      %v257 = vmul.f32 %v242, %v251
      %v258 = vmul.f32 %v243, %v251
      %v259 = vmul.f32 %v244, %v251
      %v260 = vmul.f32 %v245, %v251
      %v261 = vld [vmem:[%s2] sm:$0x1]
      %v263 = vlaneseq
      %v264 = vshrl.u32 %v263, 7
      %v265 = vsub.s32 0, %v264
      %v266 = vrot.slane %v261, %v265
      %v268 = vadd.f32 %v253, %v266
      %v269 = vadd.f32 %v254, %v266
      %v270 = vadd.f32 %v255, %v266
      %v271 = vadd.f32 %v256, %v266
      %v272 = vadd.f32 %v257, %v266
      %v273 = vadd.f32 %v258, %v266
      %v274 = vadd.f32 %v259, %v266
      %v275 = vadd.f32 %v260, %v266
      %v276 = vmax.f32 %v268, 0.0
      %v277 = vmax.f32 %v269, 0.0
      %v278 = vmax.f32 %v270, 0.0
      %v279 = vmax.f32 %v271, 0.0
      %v280 = vmax.f32 %v272, 0.0
      %v281 = vmax.f32 %v273, 0.0
      %v282 = vmax.f32 %v274, 0.0
      %v283 = vmax.f32 %v275, 0.0
      %v284 = vld [vmem:[%s3] sm:$0x1]
      %v286 = vlaneseq
      %v287 = vshrl.u32 %v286, 7
      %v288 = vsub.s32 0, %v287
      %v289 = vrot.slane %v284, %v288
      %v291 = vmul.f32 %v276, %v289
      %v292 = vmul.f32 %v277, %v289
      %v293 = vmul.f32 %v278, %v289
      %v294 = vmul.f32 %v279, %v289
      %v295 = vmul.f32 %v280, %v289
      %v296 = vmul.f32 %v281, %v289
      %v297 = vmul.f32 %v282, %v289
      %v298 = vmul.f32 %v283, %v289
      %vm299 = vcmask 39936
      %v300 = vsel %vm299, %v291, 0.0
      %301 = vadd.xlane.f32.xlu0 %v300
      %v302 = vpop.xlane.xlu0 %301
      %v303 = vsel %vm299, %v292, 0.0
      %304 = vadd.xlane.f32.xlu0 %v303
      %v305 = vpop.xlane.xlu0 %304
      %v306 = vsel %vm299, %v293, 0.0
      %307 = vadd.xlane.f32.xlu0 %v306
      %v308 = vpop.xlane.xlu0 %307
      %v309 = vsel %vm299, %v294, 0.0
      %310 = vadd.xlane.f32.xlu0 %v309
      %v311 = vpop.xlane.xlu0 %310
      %v312 = vsel %vm299, %v295, 0.0
      %313 = vadd.xlane.f32.xlu0 %v312
      %v314 = vpop.xlane.xlu0 %313
      %v315 = vsel %vm299, %v296, 0.0
      %316 = vadd.xlane.f32.xlu0 %v315
      %v317 = vpop.xlane.xlu0 %316
      %v318 = vsel %vm299, %v297, 0.0
      %319 = vadd.xlane.f32.xlu0 %v318
      %v320 = vpop.xlane.xlu0 %319
      %v321 = vsel %vm299, %v298, 0.0
      %322 = vadd.xlane.f32.xlu0 %v321
      %v323 = vpop.xlane.xlu0 %322
      %v324 = vld [vmem:[#allocation2] sm:$0x1]
      %v326 = vlaneseq
      %v327 = vshrl.u32 %v326, 7
      %v328 = vsub.s32 0, %v327
      %v329 = vrot.slane %v324, %v328
      %v331 = vadd.f32 %v302, %v329
      %v332 = vadd.f32 %v305, %v329
      %v333 = vadd.f32 %v308, %v329
      %v334 = vadd.f32 %v311, %v329
      %v335 = vadd.f32 %v314, %v329
      %v336 = vadd.f32 %v317, %v329
      %v337 = vadd.f32 %v320, %v329
      %v338 = vadd.f32 %v323, %v329
      %vm339 = vcmask 7168
      %340 = vst.msk [vmem:[%s228] sm:$0xff] %vm339, %v331
      %341 = vst.msk [vmem:[%s228 + $0x8] sm:$0xff] %vm339, %v332
      %342 = vst.msk [vmem:[%s228 + $0x10] sm:$0xff] %vm339, %v333
      %343 = vst.msk [vmem:[%s228 + $0x18] sm:$0xff] %vm339, %v334
      %344 = vst.msk [vmem:[%s228 + $0x20] sm:$0xff] %vm339, %v335
      %345 = vst.msk [vmem:[%s228 + $0x28] sm:$0xff] %vm339, %v336
      %346 = vst.msk [vmem:[%s228 + $0x30] sm:$0xff] %vm339, %v337
      %347 = vst.msk [vmem:[%s228 + $0x38] sm:$0xff] %vm339, %v338
      %s348 = smul.u32 8, %s18
      %p349 = scmp.lt.s32.totalorder %s348, 31
      %s350 = scalar_select %p349, %s348, 31
      %s351 = smul.addr %s350, 8
      %s352 = scalar_lea.vmem %s5, %s351
      // Predicated region
      $region41: #{generator_forward.7} parent=39 // pred_check
        %p353 = pneg %p146
      $region42: #{generator_forward.7} parent=39 // pred_check_branch
        %355 = sbr.rel (%p353) target = $region44
      $region43: #{generator_forward.7} parent=39 // pred_region
        %s356 = smul.u32 8, %s18
      $region44: #{generator_forward.7} parent=39 // pred_fallthru
        _
    $region40: #{generator_forward.7} parent=5 // pred_fallthru
      _
    %p357 = scmp.le.s32.totalorder 2, %s13
    // Predicated region
    $region45: #{generator_forward.7} parent=5 // pred_check
      %p358 = pneg %p357
    $region46: #{generator_forward.7} parent=5 // pred_check_branch
      %360 = sbr.rel (%p358) target = $region48
    $region47: #{generator_forward.7} parent=5 // pred_region
      %s361 = ssub.s32 %s13, 2
      // Predicated region
      $region49: #{generator_forward.7} parent=47 // pred_check
        %p362 = pneg %p152
      $region50: #{generator_forward.7} parent=47 // pred_check_branch
        %364 = sbr.rel (%p362) target = $region52
      $region51: #{generator_forward.7} parent=47 // pred_region
        %s365 = smul.u32 8, %s19
        %p366 = scmp.lt.s32.totalorder %s365, 31
        %s367 = scalar_select %p366, %s365, 31
        %s368 = smul.addr %s367, 8
        %s369 = scalar_lea.vmem %s5, %s368
      $region52: #{generator_forward.7} parent=47 // pred_fallthru
        _
    $region48: #{generator_forward.7} parent=5 // pred_fallthru
      _
  $region6: #{generator_forward.7} parent=0 // loop_footer
    %s17 = sadd.s32 1, %s13
  $region7: #{generator_forward.7} parent=0 // loop_footer_branch
    %12 = sbr.rel target = $region3
  $region8: #{generator_forward.7} parent=0 // loop_exit
    _

</llo_original>
